<compile_context>
chip_gen: v5e
topology: v5e:2x2
jax: 0.10.0
libtpu: 0.0.40
codegen_flags: <defaults>
</compile_context>

<pallas_src>
import jax
import jax.numpy as jnp
from jax.experimental import pallas as pl
from jax.experimental.pallas import tpu as pltpu

_BF16 = jnp.bfloat16
_F32 = jnp.float32


# --------------------------------------------------------------------------- #
# In-kernel building block: linear_1 + GRU.
#   doc_ref is time-major (T, BB, E); returns batch-major (BB, T, E) float32.
# --------------------------------------------------------------------------- #
def _gru_block(doc_ref, w1_t, b1, wih_t, bih, whh_t, bhh_n):
    T, BB, E = doc_ref.shape

    x = doc_ref[...].reshape(T * BB, E).astype(_BF16)
    # linear_1 : (T*BB, E) @ (E, 2E)   (bf16 operands, f32 accumulate)
    doc2 = jnp.dot(x, w1_t[...], preferred_element_type=_F32) + b1[...]
    # Input-gate projections for ALL timesteps with one MXU matmul.
    # (r/z halves of b_hh are already folded into `bih` wrapper-side.)
    gx = (jnp.dot(doc2.astype(_BF16), wih_t[...], preferred_element_type=_F32)
          + bih[...])                                     # (T*BB, 3E) time-major

    whh = whh_t[...]                                      # (E, 3E) f32 (recurrence stays f32)
    bhh_b = jnp.broadcast_to(bhh_n[...], (BB, 3 * E))     # broadcast hoisted out of the loop

    h = jnp.zeros((BB, E), _F32)                          # nn.GRU default h0 = 0
    hs = []
    # TODO(synk): for long T use lax.fori_loop + gx in a VMEM scratch.
    for t in range(T):                                    # static unroll (T small)
        gxt = gx[t * BB:(t + 1) * BB, :]                  # contiguous time-major slice
        gh = jnp.dot(h, whh, preferred_element_type=_F32) + bhh_b
        r = jax.nn.sigmoid(gxt[:, :E] + gh[:, :E])
        z = jax.nn.sigmoid(gxt[:, E:2 * E] + gh[:, E:2 * E])
        n = jnp.tanh(gxt[:, 2 * E:] + r * gh[:, 2 * E:])
        h = (1.0 - z) * n + z * h
        hs.append(h)
    return jnp.stack(hs, axis=1)                          # (BB, T, E) batch-major


# --------------------------------------------------------------------------- #
# Kernel: attention = False  (GRU -> Linear(E, num_tags))
# --------------------------------------------------------------------------- #
def _decoder_plain_kernel(doc_ref, w1_t, b1, wih_t, bih, whh_t, bhh_n,
                          wl_t, bl, out_ref):
    T, BB, E = doc_ref.shape
    NTP = out_ref.shape[-1]
    gru = _gru_block(doc_ref, w1_t, b1, wih_t, bih, whh_t, bhh_n)
    out = (jnp.dot(gru.reshape(BB * T, E).astype(_BF16), wl_t[...],
                   preferred_element_type=_F32) + bl[...])
    out_ref[...] = out.reshape(BB, T, NTP)                # lane-dense (NTP = 128k)


# --------------------------------------------------------------------------- #
# Kernel: attention = True
# --------------------------------------------------------------------------- #
def _decoder_attn_kernel(doc_ref, enc_ref,
                         w1_t, b1, wih_t, bih, whh_t, bhh_n,
                         wq_t, bq, wk_t, bk, wv_t, bv,
                         wl_att_t, wl_gru_t, bl,
                         out_ref):
    T, BB, E = doc_ref.shape
    S = enc_ref.shape[0]
    NTP = out_ref.shape[-1]

    gru = _gru_block(doc_ref, w1_t, b1, wih_t, bih, whh_t, bhh_n)   # (BB,T,E) f32
    gru_bf = gru.reshape(BB * T, E).astype(_BF16)

    # q / k / v projections as single batched matmuls (bf16 in, f32 accumulate)
    q = (jnp.dot(gru_bf, wq_t[...], preferred_element_type=_F32)
         + bq[...]).reshape(BB, T, E)
    # enc arrives seq-major (S, BB, 2E); relayout once in VMEM (no extra HBM pass)
    enc_bm = jnp.transpose(enc_ref[...], (1, 0, 2)).reshape(BB * S, 2 * E).astype(_BF16)
    k = (jnp.dot(enc_bm, wk_t[...], preferred_element_type=_F32)
         + bk[...]).reshape(BB, S, E)
    v = (jnp.dot(enc_bm, wv_t[...], preferred_element_type=_F32)
         + bv[...]).reshape(BB, S, E)

    # softmax(q @ k^T) @ v, batched over the block's batch rows
    scores = jnp.einsum('bte,bse->bts', q.astype(_BF16), k.astype(_BF16),
                        preferred_element_type=_F32)
    scores = scores - jnp.max(scores, axis=-1, keepdims=True)
    p = jnp.exp(scores)
    p = p * pl.reciprocal(jnp.sum(p, axis=-1, keepdims=True), approx=True)
    att = jnp.einsum('bts,bse->bte', p.astype(_BF16), v.astype(_BF16),
                     preferred_element_type=_F32)

    # Linear(2E, NT) over cat((att, gru)) == split-weight matmuls (no concat).
    out = (jnp.dot(att.reshape(BB * T, E).astype(_BF16), wl_att_t[...],
                   preferred_element_type=_F32)
           + jnp.dot(gru_bf, wl_gru_t[...], preferred_element_type=_F32)
           + bl[...])
    out_ref[...] = out.reshape(BB, T, NTP)                # lane-dense (NTP = 128k)


# --------------------------------------------------------------------------- #
# JAX wrapper: layout plumbing + single gridded pallas_call.
# --------------------------------------------------------------------------- #
def decoder_forward(params, doc, hidden, enc_output, *, attention=False):
    # `hidden` is accepted for API parity but the PyTorch forward never feeds
    # it to the GRU (h0 defaults to zeros), so it is ignored here too.
    del hidden
    B, T, E = doc.shape
    S = enc_output.shape[0]
    NT = params["linear_w"].shape[0]
    NTP = ((NT + 127) // 128) * 128                 # lane-dense padded output width

    # Batch block: full B if small, else 8 (sublane tile) with padding.
    if B <= 8:
        BB, B_pad = B, B
    else:
        BB, B_pad = 8, ((B + 7) // 8) * 8
    nb = B_pad // BB

    f32, bf16 = jnp.float32, jnp.bfloat16

    doc_p = doc if B_pad == B else jnp.pad(doc, ((0, B_pad - B), (0, 0), (0, 0)))
    # Time-major (mirrors PyTorch permute(1,0,2)): contiguous per-step gate slices.
    doc_tm = jnp.transpose(doc_p, (1, 0, 2)).astype(f32)          # (T, B_pad, E)

    # Fold b_hh[r|z] into b_ih (identical GRU math); keep b_hh[n] for the r*() term.
    bih, bhh = params["bih"], params["bhh"]
    bih_eff = jnp.concatenate([bih[:2 * E] + bhh[:2 * E], bih[2 * E:]]).reshape(1, 3 * E)
    bhh_n3 = jnp.concatenate([jnp.zeros((2 * E,), f32), bhh[2 * E:]]).reshape(1, 3 * E)

    common = (
        params["w1"].T.astype(bf16), params["b1"].reshape(1, -1).astype(f32),
        params["wih"].T.astype(bf16), bih_eff.astype(f32),
        params["whh"].T.astype(f32), bhh_n3.astype(f32),
    )

    def pad_out_w(w_t):  # (in, NT) -> (in, NTP) lane-padded, bf16
        return jnp.zeros((w_t.shape[0], NTP), f32).at[:, :NT].set(w_t).astype(bf16)

    bl = jnp.zeros((1, NTP), f32).at[0, :NT].set(params["linear_b"])

    if attention:
        enc_p = (enc_output if B_pad == B else
                 jnp.pad(enc_output, ((0, 0), (0, B_pad - B), (0, 0)))).astype(f32)
        wl = params["linear_w"]                    # (NT, 2E): [:, :E]->att, [:, E:]->gru
        args = (doc_tm, enc_p, *common,
                params["wq"].T.astype(bf16), params["bq"].reshape(1, -1).astype(f32),
                params["wk"].T.astype(bf16), params["bk"].reshape(1, -1).astype(f32),
                params["wv"].T.astype(bf16), params["bv"].reshape(1, -1).astype(f32),
                pad_out_w(wl[:, :E].T), pad_out_w(wl[:, E:].T), bl)
        act_specs = [pl.BlockSpec((T, BB, E), lambda b: (0, b, 0)),
                     pl.BlockSpec((S, BB, 2 * E), lambda b: (0, b, 0))]
        n_act = 2
        kernel = _decoder_attn_kernel
    else:
        args = (doc_tm, *common, pad_out_w(params["linear_w"].T), bl)
        act_specs = [pl.BlockSpec((T, BB, E), lambda b: (0, b, 0))]
        n_act = 1
        kernel = _decoder_plain_kernel

    # Weights/biases: pinned index_map -> VMEM-resident across all grid steps.
    in_specs = act_specs + [pl.BlockSpec(a.shape, lambda b: (0, 0))
                            for a in args[n_act:]]

    # Explicit VMEM budget: resident weights + pipelined blocks + intermediates.
    weight_bytes = sum(int(a.size) * a.dtype.itemsize for a in args[n_act:])
    blk_bytes = 4 * (T * BB * E + (S * BB * 2 * E if attention else 0) + BB * T * NTP)
    interm_bytes = 4 * (8 * T * BB * E + 4 * S * BB * E + BB * T * S)
    vmem_limit = int(min(max(weight_bytes + 3 * blk_bytes + interm_bytes + (4 << 20),
                             32 << 20), 100 << 20))

    out = pl.pallas_call(
        kernel,
        out_shape=jax.ShapeDtypeStruct((B_pad, T, NTP), f32),
        grid=(nb,),
        in_specs=in_specs,
        out_specs=pl.BlockSpec((BB, T, NTP), lambda b: (b, 0, 0)),
        compiler_params=pltpu.CompilerParams(
            dimension_semantics=("parallel",),
            vmem_limit_bytes=vmem_limit),
    )(*args)
    return out[:B, :, :NT]


# --------------------------------------------------------------------------- #
# Pure-JAX reference (mirrors the PyTorch forward exactly) for self-checking.
# --------------------------------------------------------------------------- #
def decoder_reference(params, doc, hidden, enc_output, *, attention=False):
    del hidden
    Bv, Tv, E = doc.shape
    doc2 = doc @ params["w1"].T + params["b1"]                    # (B,T,2E)
    h = jnp.zeros((Bv, E), jnp.float32)
    outs = []
    for t in range(Tv):
        x = doc2[:, t, :]
        gx = x @ params["wih"].T + params["bih"]
        gh = h @ params["whh"].T + params["bhh"]
        r = jax.nn.sigmoid(gx[:, :E] + gh[:, :E])
        z = jax.nn.sigmoid(gx[:, E:2 * E] + gh[:, E:2 * E])
        n = jnp.tanh(gx[:, 2 * E:] + r * gh[:, 2 * E:])
        h = (1.0 - z) * n + z * h
        outs.append(h)
    gru = jnp.stack(outs, axis=1)                                 # (B,T,E)
    if attention:
        q = gru @ params["wq"].T + params["bq"]                   # (B,T,E)
        k = enc_output @ params["wk"].T + params["bk"]            # (S,B,E)
        v = enc_output @ params["wv"].T + params["bv"]            # (S,B,E)
        k = jnp.transpose(k, (1, 2, 0))                           # (B,E,S)
        v = jnp.transpose(v, (1, 0, 2))                           # (B,S,E)
        w = jax.nn.softmax(jnp.einsum('bte,bes->bts', q, k), axis=-1)
        att = jnp.einsum('bts,bse->bte', w, v)
        feat = jnp.concatenate([att, gru], axis=-1)
    else:
        feat = gru
    return feat @ params["linear_w"].T + params["linear_b"]


# --------------------------------------------------------------------------- #
if __name__ == "__main__":
    B, T, S = 2, 8, 8           # batch, decoder seq len, encoder seq len
    E, NT = 32, 20              # emb_size (scaled down from 768), num_tags

    key = jax.random.PRNGKey(0)
    ks = jax.random.split(key, 20)

    def nrm(k, shape, scale=0.3):
        return scale * jax.random.normal(k, shape, dtype=jnp.float32)

    doc = nrm(ks[0], (B, T, E))
    hidden = jnp.zeros((1, B, E), jnp.float32)        # unused by the forward
    enc_output = nrm(ks[1], (S, B, 2 * E))            # PyTorch seq-first layout

    base = dict(
        w1=nrm(ks[2], (2 * E, E)), b1=nrm(ks[3], (2 * E,)),
        wih=nrm(ks[4], (3 * E, 2 * E)), bih=nrm(ks[5], (3 * E,)),
        whh=nrm(ks[6], (3 * E, E)), bhh=nrm(ks[7], (3 * E,)),
        wq=nrm(ks[8], (E, E)), bq=nrm(ks[9], (E,)),
        wk=nrm(ks[10], (E, 2 * E)), bk=nrm(ks[11], (E,)),
        wv=nrm(ks[12], (E, 2 * E)), bv=nrm(ks[13], (E,)),
    )
    params_plain = dict(base, linear_w=nrm(ks[14], (NT, E)),
                        linear_b=nrm(ks[15], (NT,)))
    params_attn = dict(base, linear_w=nrm(ks[16], (NT, 2 * E)),
                       linear_b=nrm(ks[17], (NT,)))

    out_plain = decoder_forward(params_plain, doc, hidden, enc_output,
                                attention=False)
    out_attn = decoder_forward(params_attn, doc, hidden, enc_output,
                               attention=True)
    jax.block_until_ready((out_plain, out_attn))

    ref_plain = decoder_reference(params_plain, doc, hidden, enc_output,
                                  attention=False)
    ref_attn = decoder_reference(params_attn, doc, hidden, enc_output,
                                 attention=True)

    assert out_plain.shape == (B, T, NT)
    assert out_attn.shape == (B, T, NT)
    assert bool(jnp.all(jnp.isfinite(out_plain)))
    assert bool(jnp.all(jnp.isfinite(out_attn)))
    # bf16 MXU operands (f32 accumulate) + approx reciprocal => looser tolerance
    # than a pure-f32 comparison; real bugs produce O(1) deviations.
    assert bool(jnp.allclose(out_plain, ref_plain, rtol=5e-2, atol=5e-2))
    assert bool(jnp.allclose(out_attn, ref_attn, rtol=5e-2, atol=5e-2))
    print("KERNEL_OK")
</pallas_src>

<mosaic_0001>
module attributes {stable_mosaic.version = 11 : i64} {
  func.func @_decoder_plain_kernel(%arg0: i32, %arg1: memref<8x2x32xf32, #tpu.memory_space<vmem>>, %arg2: memref<32x64xbf16, #tpu.memory_space<vmem>>, %arg3: memref<1x64xf32, #tpu.memory_space<vmem>>, %arg4: memref<64x96xbf16, #tpu.memory_space<vmem>>, %arg5: memref<1x96xf32, #tpu.memory_space<vmem>>, %arg6: memref<32x96xf32, #tpu.memory_space<vmem>>, %arg7: memref<1x96xf32, #tpu.memory_space<vmem>>, %arg8: memref<32x128xbf16, #tpu.memory_space<vmem>>, %arg9: memref<1x128xf32, #tpu.memory_space<vmem>>, %arg10: memref<2x8x128xf32, #tpu.memory_space<vmem>>) attributes {dimension_semantics = [#tpu.dimension_semantics<parallel>], iteration_bounds = array<i64: 1>, scalar_prefetch = 0 : i64, scratch_operands = 0 : i64, tpu.core_type = #tpu.core_type<tc>, window_params = [{transform_indices = @transform_0, window_bounds = array<i64: 8, 2, 32>}, {pipeline_mode = #tpu.pipeline_mode<synchronous>, transform_indices = @transform_1, window_bounds = array<i64: 32, 64>}, {pipeline_mode = #tpu.pipeline_mode<synchronous>, transform_indices = @transform_2, window_bounds = array<i64: 1, 64>}, {pipeline_mode = #tpu.pipeline_mode<synchronous>, transform_indices = @transform_3, window_bounds = array<i64: 64, 96>}, {pipeline_mode = #tpu.pipeline_mode<synchronous>, transform_indices = @transform_4, window_bounds = array<i64: 1, 96>}, {pipeline_mode = #tpu.pipeline_mode<synchronous>, transform_indices = @transform_5, window_bounds = array<i64: 32, 96>}, {pipeline_mode = #tpu.pipeline_mode<synchronous>, transform_indices = @transform_6, window_bounds = array<i64: 1, 96>}, {pipeline_mode = #tpu.pipeline_mode<synchronous>, transform_indices = @transform_7, window_bounds = array<i64: 32, 128>}, {pipeline_mode = #tpu.pipeline_mode<synchronous>, transform_indices = @transform_8, window_bounds = array<i64: 1, 128>}, {transform_indices = @transform_9, window_bounds = array<i64: 2, 8, 128>}]} {
    %c0 = arith.constant 0 : index
    %c0_0 = arith.constant 0 : index
    %c0_1 = arith.constant 0 : index
    %0 = vector.load %arg1[%c0, %c0_0, %c0_1] : memref<8x2x32xf32, #tpu.memory_space<vmem>>, vector<8x2x32xf32>
    %1 = vector.shape_cast %0 : vector<8x2x32xf32> to vector<16x32xf32>
    %2 = arith.truncf %1 : vector<16x32xf32> to vector<16x32xbf16>
    %c0_2 = arith.constant 0 : index
    %c0_3 = arith.constant 0 : index
    %3 = vector.load %arg2[%c0_2, %c0_3] : memref<32x64xbf16, #tpu.memory_space<vmem>>, vector<32x64xbf16>
    %cst = arith.constant dense<0.000000e+00> : vector<16x64xf32>
    %4 = tpu.matmul %2, %3, %cst {dimension_numbers = #tpu.dot_dimension_numbers<[1], [0], [0], [1], [0, 0, 1, 1], [], []>} : vector<16x32xbf16>, vector<32x64xbf16>, vector<16x64xf32> -> vector<16x64xf32>
    %c0_4 = arith.constant 0 : index
    %c0_5 = arith.constant 0 : index
    %5 = vector.load %arg3[%c0_4, %c0_5] : memref<1x64xf32, #tpu.memory_space<vmem>>, vector<1x64xf32>
    %6 = vector.broadcast %5 : vector<1x64xf32> to vector<16x64xf32>
    %7 = arith.addf %4, %6 : vector<16x64xf32>
    %8 = arith.truncf %7 : vector<16x64xf32> to vector<16x64xbf16>
    %c0_6 = arith.constant 0 : index
    %c0_7 = arith.constant 0 : index
    %9 = vector.load %arg4[%c0_6, %c0_7] : memref<64x96xbf16, #tpu.memory_space<vmem>>, vector<64x96xbf16>
    %cst_8 = arith.constant dense<0.000000e+00> : vector<16x96xf32>
    %10 = tpu.matmul %8, %9, %cst_8 {dimension_numbers = #tpu.dot_dimension_numbers<[1], [0], [0], [1], [0, 0, 1, 1], [], []>} : vector<16x64xbf16>, vector<64x96xbf16>, vector<16x96xf32> -> vector<16x96xf32>
    %c0_9 = arith.constant 0 : index
    %c0_10 = arith.constant 0 : index
    %11 = vector.load %arg5[%c0_9, %c0_10] : memref<1x96xf32, #tpu.memory_space<vmem>>, vector<1x96xf32>
    %12 = vector.broadcast %11 : vector<1x96xf32> to vector<16x96xf32>
    %13 = arith.addf %10, %12 : vector<16x96xf32>
    %c0_11 = arith.constant 0 : index
    %c0_12 = arith.constant 0 : index
    %14 = vector.load %arg6[%c0_11, %c0_12] : memref<32x96xf32, #tpu.memory_space<vmem>>, vector<32x96xf32>
    %c0_13 = arith.constant 0 : index
    %c0_14 = arith.constant 0 : index
    %15 = vector.load %arg7[%c0_13, %c0_14] : memref<1x96xf32, #tpu.memory_space<vmem>>, vector<1x96xf32>
    %16 = vector.shape_cast %15 : vector<1x96xf32> to vector<1x96xf32>
    %17 = vector.broadcast %16 : vector<1x96xf32> to vector<2x96xf32>
    %cst_15 = arith.constant 0.000000e+00 : f32
    %18 = vector.broadcast %cst_15 : f32 to vector<2x32xf32>
    %19 = vector.extract_strided_slice %13 {offsets = [0, 0], sizes = [2, 96], strides = [1, 1]} : vector<16x96xf32> to vector<2x96xf32>
    %cst_16 = arith.constant dense<0.000000e+00> : vector<2x96xf32>
    %20 = tpu.matmul %18, %14, %cst_16 {dimension_numbers = #tpu.dot_dimension_numbers<[1], [0], [0], [1], [0, 0, 1, 1], [], []>} : vector<2x32xf32>, vector<32x96xf32>, vector<2x96xf32> -> vector<2x96xf32>
    %21 = arith.addf %20, %17 : vector<2x96xf32>
    %22 = vector.extract_strided_slice %19 {offsets = [0, 0], sizes = [2, 32], strides = [1, 1]} : vector<2x96xf32> to vector<2x32xf32>
    %23 = vector.extract_strided_slice %21 {offsets = [0, 0], sizes = [2, 32], strides = [1, 1]} : vector<2x96xf32> to vector<2x32xf32>
    %24 = arith.addf %22, %23 : vector<2x32xf32>
    %25 = arith.negf %24 : vector<2x32xf32>
    %26 = math.exp %25 : vector<2x32xf32>
    %cst_17 = arith.constant 1.000000e+00 : f32
    %27 = vector.broadcast %cst_17 : f32 to vector<2x32xf32>
    %28 = arith.addf %27, %26 : vector<2x32xf32>
    %29 = arith.divf %27, %28 : vector<2x32xf32>
    %30 = vector.extract_strided_slice %19 {offsets = [0, 32], sizes = [2, 32], strides = [1, 1]} : vector<2x96xf32> to vector<2x32xf32>
    %31 = vector.extract_strided_slice %21 {offsets = [0, 32], sizes = [2, 32], strides = [1, 1]} : vector<2x96xf32> to vector<2x32xf32>
    %32 = arith.addf %30, %31 : vector<2x32xf32>
    %33 = arith.negf %32 : vector<2x32xf32>
    %34 = math.exp %33 : vector<2x32xf32>
    %cst_18 = arith.constant 1.000000e+00 : f32
    %35 = vector.broadcast %cst_18 : f32 to vector<2x32xf32>
    %36 = arith.addf %35, %34 : vector<2x32xf32>
    %37 = arith.divf %35, %36 : vector<2x32xf32>
    %38 = vector.extract_strided_slice %19 {offsets = [0, 64], sizes = [2, 32], strides = [1, 1]} : vector<2x96xf32> to vector<2x32xf32>
    %39 = vector.extract_strided_slice %21 {offsets = [0, 64], sizes = [2, 32], strides = [1, 1]} : vector<2x96xf32> to vector<2x32xf32>
    %40 = arith.mulf %29, %39 : vector<2x32xf32>
    %41 = arith.addf %38, %40 : vector<2x32xf32>
    %42 = math.tanh %41 : vector<2x32xf32>
    %cst_19 = arith.constant 1.000000e+00 : f32
    %43 = vector.broadcast %cst_19 : f32 to vector<2x32xf32>
    %44 = arith.subf %43, %37 : vector<2x32xf32>
    %45 = arith.mulf %44, %42 : vector<2x32xf32>
    %46 = arith.mulf %37, %18 : vector<2x32xf32>
    %47 = arith.addf %45, %46 : vector<2x32xf32>
    %48 = vector.extract_strided_slice %13 {offsets = [2, 0], sizes = [2, 96], strides = [1, 1]} : vector<16x96xf32> to vector<2x96xf32>
    %cst_20 = arith.constant dense<0.000000e+00> : vector<2x96xf32>
    %49 = tpu.matmul %47, %14, %cst_20 {dimension_numbers = #tpu.dot_dimension_numbers<[1], [0], [0], [1], [0, 0, 1, 1], [], []>} : vector<2x32xf32>, vector<32x96xf32>, vector<2x96xf32> -> vector<2x96xf32>
    %50 = arith.addf %49, %17 : vector<2x96xf32>
    %51 = vector.extract_strided_slice %48 {offsets = [0, 0], sizes = [2, 32], strides = [1, 1]} : vector<2x96xf32> to vector<2x32xf32>
    %52 = vector.extract_strided_slice %50 {offsets = [0, 0], sizes = [2, 32], strides = [1, 1]} : vector<2x96xf32> to vector<2x32xf32>
    %53 = arith.addf %51, %52 : vector<2x32xf32>
    %54 = arith.negf %53 : vector<2x32xf32>
    %55 = math.exp %54 : vector<2x32xf32>
    %cst_21 = arith.constant 1.000000e+00 : f32
    %56 = vector.broadcast %cst_21 : f32 to vector<2x32xf32>
    %57 = arith.addf %56, %55 : vector<2x32xf32>
    %58 = arith.divf %56, %57 : vector<2x32xf32>
    %59 = vector.extract_strided_slice %48 {offsets = [0, 32], sizes = [2, 32], strides = [1, 1]} : vector<2x96xf32> to vector<2x32xf32>
    %60 = vector.extract_strided_slice %50 {offsets = [0, 32], sizes = [2, 32], strides = [1, 1]} : vector<2x96xf32> to vector<2x32xf32>
    %61 = arith.addf %59, %60 : vector<2x32xf32>
    %62 = arith.negf %61 : vector<2x32xf32>
    %63 = math.exp %62 : vector<2x32xf32>
    %cst_22 = arith.constant 1.000000e+00 : f32
    %64 = vector.broadcast %cst_22 : f32 to vector<2x32xf32>
    %65 = arith.addf %64, %63 : vector<2x32xf32>
    %66 = arith.divf %64, %65 : vector<2x32xf32>
    %67 = vector.extract_strided_slice %48 {offsets = [0, 64], sizes = [2, 32], strides = [1, 1]} : vector<2x96xf32> to vector<2x32xf32>
    %68 = vector.extract_strided_slice %50 {offsets = [0, 64], sizes = [2, 32], strides = [1, 1]} : vector<2x96xf32> to vector<2x32xf32>
    %69 = arith.mulf %58, %68 : vector<2x32xf32>
    %70 = arith.addf %67, %69 : vector<2x32xf32>
    %71 = math.tanh %70 : vector<2x32xf32>
    %cst_23 = arith.constant 1.000000e+00 : f32
    %72 = vector.broadcast %cst_23 : f32 to vector<2x32xf32>
    %73 = arith.subf %72, %66 : vector<2x32xf32>
    %74 = arith.mulf %73, %71 : vector<2x32xf32>
    %75 = arith.mulf %66, %47 : vector<2x32xf32>
    %76 = arith.addf %74, %75 : vector<2x32xf32>
    %77 = vector.extract_strided_slice %13 {offsets = [4, 0], sizes = [2, 96], strides = [1, 1]} : vector<16x96xf32> to vector<2x96xf32>
    %cst_24 = arith.constant dense<0.000000e+00> : vector<2x96xf32>
    %78 = tpu.matmul %76, %14, %cst_24 {dimension_numbers = #tpu.dot_dimension_numbers<[1], [0], [0], [1], [0, 0, 1, 1], [], []>} : vector<2x32xf32>, vector<32x96xf32>, vector<2x96xf32> -> vector<2x96xf32>
    %79 = arith.addf %78, %17 : vector<2x96xf32>
    %80 = vector.extract_strided_slice %77 {offsets = [0, 0], sizes = [2, 32], strides = [1, 1]} : vector<2x96xf32> to vector<2x32xf32>
    %81 = vector.extract_strided_slice %79 {offsets = [0, 0], sizes = [2, 32], strides = [1, 1]} : vector<2x96xf32> to vector<2x32xf32>
    %82 = arith.addf %80, %81 : vector<2x32xf32>
    %83 = arith.negf %82 : vector<2x32xf32>
    %84 = math.exp %83 : vector<2x32xf32>
    %cst_25 = arith.constant 1.000000e+00 : f32
    %85 = vector.broadcast %cst_25 : f32 to vector<2x32xf32>
    %86 = arith.addf %85, %84 : vector<2x32xf32>
    %87 = arith.divf %85, %86 : vector<2x32xf32>
    %88 = vector.extract_strided_slice %77 {offsets = [0, 32], sizes = [2, 32], strides = [1, 1]} : vector<2x96xf32> to vector<2x32xf32>
    %89 = vector.extract_strided_slice %79 {offsets = [0, 32], sizes = [2, 32], strides = [1, 1]} : vector<2x96xf32> to vector<2x32xf32>
    %90 = arith.addf %88, %89 : vector<2x32xf32>
    %91 = arith.negf %90 : vector<2x32xf32>
    %92 = math.exp %91 : vector<2x32xf32>
    %cst_26 = arith.constant 1.000000e+00 : f32
    %93 = vector.broadcast %cst_26 : f32 to vector<2x32xf32>
    %94 = arith.addf %93, %92 : vector<2x32xf32>
    %95 = arith.divf %93, %94 : vector<2x32xf32>
    %96 = vector.extract_strided_slice %77 {offsets = [0, 64], sizes = [2, 32], strides = [1, 1]} : vector<2x96xf32> to vector<2x32xf32>
    %97 = vector.extract_strided_slice %79 {offsets = [0, 64], sizes = [2, 32], strides = [1, 1]} : vector<2x96xf32> to vector<2x32xf32>
    %98 = arith.mulf %87, %97 : vector<2x32xf32>
    %99 = arith.addf %96, %98 : vector<2x32xf32>
    %100 = math.tanh %99 : vector<2x32xf32>
    %cst_27 = arith.constant 1.000000e+00 : f32
    %101 = vector.broadcast %cst_27 : f32 to vector<2x32xf32>
    %102 = arith.subf %101, %95 : vector<2x32xf32>
    %103 = arith.mulf %102, %100 : vector<2x32xf32>
    %104 = arith.mulf %95, %76 : vector<2x32xf32>
    %105 = arith.addf %103, %104 : vector<2x32xf32>
    %106 = vector.extract_strided_slice %13 {offsets = [6, 0], sizes = [2, 96], strides = [1, 1]} : vector<16x96xf32> to vector<2x96xf32>
    %cst_28 = arith.constant dense<0.000000e+00> : vector<2x96xf32>
    %107 = tpu.matmul %105, %14, %cst_28 {dimension_numbers = #tpu.dot_dimension_numbers<[1], [0], [0], [1], [0, 0, 1, 1], [], []>} : vector<2x32xf32>, vector<32x96xf32>, vector<2x96xf32> -> vector<2x96xf32>
    %108 = arith.addf %107, %17 : vector<2x96xf32>
    %109 = vector.extract_strided_slice %106 {offsets = [0, 0], sizes = [2, 32], strides = [1, 1]} : vector<2x96xf32> to vector<2x32xf32>
    %110 = vector.extract_strided_slice %108 {offsets = [0, 0], sizes = [2, 32], strides = [1, 1]} : vector<2x96xf32> to vector<2x32xf32>
    %111 = arith.addf %109, %110 : vector<2x32xf32>
    %112 = arith.negf %111 : vector<2x32xf32>
    %113 = math.exp %112 : vector<2x32xf32>
    %cst_29 = arith.constant 1.000000e+00 : f32
    %114 = vector.broadcast %cst_29 : f32 to vector<2x32xf32>
    %115 = arith.addf %114, %113 : vector<2x32xf32>
    %116 = arith.divf %114, %115 : vector<2x32xf32>
    %117 = vector.extract_strided_slice %106 {offsets = [0, 32], sizes = [2, 32], strides = [1, 1]} : vector<2x96xf32> to vector<2x32xf32>
    %118 = vector.extract_strided_slice %108 {offsets = [0, 32], sizes = [2, 32], strides = [1, 1]} : vector<2x96xf32> to vector<2x32xf32>
    %119 = arith.addf %117, %118 : vector<2x32xf32>
    %120 = arith.negf %119 : vector<2x32xf32>
    %121 = math.exp %120 : vector<2x32xf32>
    %cst_30 = arith.constant 1.000000e+00 : f32
    %122 = vector.broadcast %cst_30 : f32 to vector<2x32xf32>
    %123 = arith.addf %122, %121 : vector<2x32xf32>
    %124 = arith.divf %122, %123 : vector<2x32xf32>
    %125 = vector.extract_strided_slice %106 {offsets = [0, 64], sizes = [2, 32], strides = [1, 1]} : vector<2x96xf32> to vector<2x32xf32>
    %126 = vector.extract_strided_slice %108 {offsets = [0, 64], sizes = [2, 32], strides = [1, 1]} : vector<2x96xf32> to vector<2x32xf32>
    %127 = arith.mulf %116, %126 : vector<2x32xf32>
    %128 = arith.addf %125, %127 : vector<2x32xf32>
    %129 = math.tanh %128 : vector<2x32xf32>
    %cst_31 = arith.constant 1.000000e+00 : f32
    %130 = vector.broadcast %cst_31 : f32 to vector<2x32xf32>
    %131 = arith.subf %130, %124 : vector<2x32xf32>
    %132 = arith.mulf %131, %129 : vector<2x32xf32>
    %133 = arith.mulf %124, %105 : vector<2x32xf32>
    %134 = arith.addf %132, %133 : vector<2x32xf32>
    %135 = vector.extract_strided_slice %13 {offsets = [8, 0], sizes = [2, 96], strides = [1, 1]} : vector<16x96xf32> to vector<2x96xf32>
    %cst_32 = arith.constant dense<0.000000e+00> : vector<2x96xf32>
    %136 = tpu.matmul %134, %14, %cst_32 {dimension_numbers = #tpu.dot_dimension_numbers<[1], [0], [0], [1], [0, 0, 1, 1], [], []>} : vector<2x32xf32>, vector<32x96xf32>, vector<2x96xf32> -> vector<2x96xf32>
    %137 = arith.addf %136, %17 : vector<2x96xf32>
    %138 = vector.extract_strided_slice %135 {offsets = [0, 0], sizes = [2, 32], strides = [1, 1]} : vector<2x96xf32> to vector<2x32xf32>
    %139 = vector.extract_strided_slice %137 {offsets = [0, 0], sizes = [2, 32], strides = [1, 1]} : vector<2x96xf32> to vector<2x32xf32>
    %140 = arith.addf %138, %139 : vector<2x32xf32>
    %141 = arith.negf %140 : vector<2x32xf32>
    %142 = math.exp %141 : vector<2x32xf32>
    %cst_33 = arith.constant 1.000000e+00 : f32
    %143 = vector.broadcast %cst_33 : f32 to vector<2x32xf32>
    %144 = arith.addf %143, %142 : vector<2x32xf32>
    %145 = arith.divf %143, %144 : vector<2x32xf32>
    %146 = vector.extract_strided_slice %135 {offsets = [0, 32], sizes = [2, 32], strides = [1, 1]} : vector<2x96xf32> to vector<2x32xf32>
    %147 = vector.extract_strided_slice %137 {offsets = [0, 32], sizes = [2, 32], strides = [1, 1]} : vector<2x96xf32> to vector<2x32xf32>
    %148 = arith.addf %146, %147 : vector<2x32xf32>
    %149 = arith.negf %148 : vector<2x32xf32>
    %150 = math.exp %149 : vector<2x32xf32>
    %cst_34 = arith.constant 1.000000e+00 : f32
    %151 = vector.broadcast %cst_34 : f32 to vector<2x32xf32>
    %152 = arith.addf %151, %150 : vector<2x32xf32>
    %153 = arith.divf %151, %152 : vector<2x32xf32>
    %154 = vector.extract_strided_slice %135 {offsets = [0, 64], sizes = [2, 32], strides = [1, 1]} : vector<2x96xf32> to vector<2x32xf32>
    %155 = vector.extract_strided_slice %137 {offsets = [0, 64], sizes = [2, 32], strides = [1, 1]} : vector<2x96xf32> to vector<2x32xf32>
    %156 = arith.mulf %145, %155 : vector<2x32xf32>
    %157 = arith.addf %154, %156 : vector<2x32xf32>
    %158 = math.tanh %157 : vector<2x32xf32>
    %cst_35 = arith.constant 1.000000e+00 : f32
    %159 = vector.broadcast %cst_35 : f32 to vector<2x32xf32>
    %160 = arith.subf %159, %153 : vector<2x32xf32>
    %161 = arith.mulf %160, %158 : vector<2x32xf32>
    %162 = arith.mulf %153, %134 : vector<2x32xf32>
    %163 = arith.addf %161, %162 : vector<2x32xf32>
    %164 = vector.extract_strided_slice %13 {offsets = [10, 0], sizes = [2, 96], strides = [1, 1]} : vector<16x96xf32> to vector<2x96xf32>
    %cst_36 = arith.constant dense<0.000000e+00> : vector<2x96xf32>
    %165 = tpu.matmul %163, %14, %cst_36 {dimension_numbers = #tpu.dot_dimension_numbers<[1], [0], [0], [1], [0, 0, 1, 1], [], []>} : vector<2x32xf32>, vector<32x96xf32>, vector<2x96xf32> -> vector<2x96xf32>
    %166 = arith.addf %165, %17 : vector<2x96xf32>
    %167 = vector.extract_strided_slice %164 {offsets = [0, 0], sizes = [2, 32], strides = [1, 1]} : vector<2x96xf32> to vector<2x32xf32>
    %168 = vector.extract_strided_slice %166 {offsets = [0, 0], sizes = [2, 32], strides = [1, 1]} : vector<2x96xf32> to vector<2x32xf32>
    %169 = arith.addf %167, %168 : vector<2x32xf32>
    %170 = arith.negf %169 : vector<2x32xf32>
    %171 = math.exp %170 : vector<2x32xf32>
    %cst_37 = arith.constant 1.000000e+00 : f32
    %172 = vector.broadcast %cst_37 : f32 to vector<2x32xf32>
    %173 = arith.addf %172, %171 : vector<2x32xf32>
    %174 = arith.divf %172, %173 : vector<2x32xf32>
    %175 = vector.extract_strided_slice %164 {offsets = [0, 32], sizes = [2, 32], strides = [1, 1]} : vector<2x96xf32> to vector<2x32xf32>
    %176 = vector.extract_strided_slice %166 {offsets = [0, 32], sizes = [2, 32], strides = [1, 1]} : vector<2x96xf32> to vector<2x32xf32>
    %177 = arith.addf %175, %176 : vector<2x32xf32>
    %178 = arith.negf %177 : vector<2x32xf32>
    %179 = math.exp %178 : vector<2x32xf32>
    %cst_38 = arith.constant 1.000000e+00 : f32
    %180 = vector.broadcast %cst_38 : f32 to vector<2x32xf32>
    %181 = arith.addf %180, %179 : vector<2x32xf32>
    %182 = arith.divf %180, %181 : vector<2x32xf32>
    %183 = vector.extract_strided_slice %164 {offsets = [0, 64], sizes = [2, 32], strides = [1, 1]} : vector<2x96xf32> to vector<2x32xf32>
    %184 = vector.extract_strided_slice %166 {offsets = [0, 64], sizes = [2, 32], strides = [1, 1]} : vector<2x96xf32> to vector<2x32xf32>
    %185 = arith.mulf %174, %184 : vector<2x32xf32>
    %186 = arith.addf %183, %185 : vector<2x32xf32>
    %187 = math.tanh %186 : vector<2x32xf32>
    %cst_39 = arith.constant 1.000000e+00 : f32
    %188 = vector.broadcast %cst_39 : f32 to vector<2x32xf32>
    %189 = arith.subf %188, %182 : vector<2x32xf32>
    %190 = arith.mulf %189, %187 : vector<2x32xf32>
    %191 = arith.mulf %182, %163 : vector<2x32xf32>
    %192 = arith.addf %190, %191 : vector<2x32xf32>
    %193 = vector.extract_strided_slice %13 {offsets = [12, 0], sizes = [2, 96], strides = [1, 1]} : vector<16x96xf32> to vector<2x96xf32>
    %cst_40 = arith.constant dense<0.000000e+00> : vector<2x96xf32>
    %194 = tpu.matmul %192, %14, %cst_40 {dimension_numbers = #tpu.dot_dimension_numbers<[1], [0], [0], [1], [0, 0, 1, 1], [], []>} : vector<2x32xf32>, vector<32x96xf32>, vector<2x96xf32> -> vector<2x96xf32>
    %195 = arith.addf %194, %17 : vector<2x96xf32>
    %196 = vector.extract_strided_slice %193 {offsets = [0, 0], sizes = [2, 32], strides = [1, 1]} : vector<2x96xf32> to vector<2x32xf32>
    %197 = vector.extract_strided_slice %195 {offsets = [0, 0], sizes = [2, 32], strides = [1, 1]} : vector<2x96xf32> to vector<2x32xf32>
    %198 = arith.addf %196, %197 : vector<2x32xf32>
    %199 = arith.negf %198 : vector<2x32xf32>
    %200 = math.exp %199 : vector<2x32xf32>
    %cst_41 = arith.constant 1.000000e+00 : f32
    %201 = vector.broadcast %cst_41 : f32 to vector<2x32xf32>
    %202 = arith.addf %201, %200 : vector<2x32xf32>
    %203 = arith.divf %201, %202 : vector<2x32xf32>
    %204 = vector.extract_strided_slice %193 {offsets = [0, 32], sizes = [2, 32], strides = [1, 1]} : vector<2x96xf32> to vector<2x32xf32>
    %205 = vector.extract_strided_slice %195 {offsets = [0, 32], sizes = [2, 32], strides = [1, 1]} : vector<2x96xf32> to vector<2x32xf32>
    %206 = arith.addf %204, %205 : vector<2x32xf32>
    %207 = arith.negf %206 : vector<2x32xf32>
    %208 = math.exp %207 : vector<2x32xf32>
    %cst_42 = arith.constant 1.000000e+00 : f32
    %209 = vector.broadcast %cst_42 : f32 to vector<2x32xf32>
    %210 = arith.addf %209, %208 : vector<2x32xf32>
    %211 = arith.divf %209, %210 : vector<2x32xf32>
    %212 = vector.extract_strided_slice %193 {offsets = [0, 64], sizes = [2, 32], strides = [1, 1]} : vector<2x96xf32> to vector<2x32xf32>
    %213 = vector.extract_strided_slice %195 {offsets = [0, 64], sizes = [2, 32], strides = [1, 1]} : vector<2x96xf32> to vector<2x32xf32>
    %214 = arith.mulf %203, %213 : vector<2x32xf32>
    %215 = arith.addf %212, %214 : vector<2x32xf32>
    %216 = math.tanh %215 : vector<2x32xf32>
    %cst_43 = arith.constant 1.000000e+00 : f32
    %217 = vector.broadcast %cst_43 : f32 to vector<2x32xf32>
    %218 = arith.subf %217, %211 : vector<2x32xf32>
    %219 = arith.mulf %218, %216 : vector<2x32xf32>
    %220 = arith.mulf %211, %192 : vector<2x32xf32>
    %221 = arith.addf %219, %220 : vector<2x32xf32>
    %222 = vector.extract_strided_slice %13 {offsets = [14, 0], sizes = [2, 96], strides = [1, 1]} : vector<16x96xf32> to vector<2x96xf32>
    %cst_44 = arith.constant dense<0.000000e+00> : vector<2x96xf32>
    %223 = tpu.matmul %221, %14, %cst_44 {dimension_numbers = #tpu.dot_dimension_numbers<[1], [0], [0], [1], [0, 0, 1, 1], [], []>} : vector<2x32xf32>, vector<32x96xf32>, vector<2x96xf32> -> vector<2x96xf32>
    %224 = arith.addf %223, %17 : vector<2x96xf32>
    %225 = vector.extract_strided_slice %222 {offsets = [0, 0], sizes = [2, 32], strides = [1, 1]} : vector<2x96xf32> to vector<2x32xf32>
    %226 = vector.extract_strided_slice %224 {offsets = [0, 0], sizes = [2, 32], strides = [1, 1]} : vector<2x96xf32> to vector<2x32xf32>
    %227 = arith.addf %225, %226 : vector<2x32xf32>
    %228 = arith.negf %227 : vector<2x32xf32>
    %229 = math.exp %228 : vector<2x32xf32>
    %cst_45 = arith.constant 1.000000e+00 : f32
    %230 = vector.broadcast %cst_45 : f32 to vector<2x32xf32>
    %231 = arith.addf %230, %229 : vector<2x32xf32>
    %232 = arith.divf %230, %231 : vector<2x32xf32>
    %233 = vector.extract_strided_slice %222 {offsets = [0, 32], sizes = [2, 32], strides = [1, 1]} : vector<2x96xf32> to vector<2x32xf32>
    %234 = vector.extract_strided_slice %224 {offsets = [0, 32], sizes = [2, 32], strides = [1, 1]} : vector<2x96xf32> to vector<2x32xf32>
    %235 = arith.addf %233, %234 : vector<2x32xf32>
    %236 = arith.negf %235 : vector<2x32xf32>
    %237 = math.exp %236 : vector<2x32xf32>
    %cst_46 = arith.constant 1.000000e+00 : f32
    %238 = vector.broadcast %cst_46 : f32 to vector<2x32xf32>
    %239 = arith.addf %238, %237 : vector<2x32xf32>
    %240 = arith.divf %238, %239 : vector<2x32xf32>
    %241 = vector.extract_strided_slice %222 {offsets = [0, 64], sizes = [2, 32], strides = [1, 1]} : vector<2x96xf32> to vector<2x32xf32>
    %242 = vector.extract_strided_slice %224 {offsets = [0, 64], sizes = [2, 32], strides = [1, 1]} : vector<2x96xf32> to vector<2x32xf32>
    %243 = arith.mulf %232, %242 : vector<2x32xf32>
    %244 = arith.addf %241, %243 : vector<2x32xf32>
    %245 = math.tanh %244 : vector<2x32xf32>
    %cst_47 = arith.constant 1.000000e+00 : f32
    %246 = vector.broadcast %cst_47 : f32 to vector<2x32xf32>
    %247 = arith.subf %246, %240 : vector<2x32xf32>
    %248 = arith.mulf %247, %245 : vector<2x32xf32>
    %249 = arith.mulf %240, %221 : vector<2x32xf32>
    %250 = arith.addf %248, %249 : vector<2x32xf32>
    %251 = vector.shape_cast %47 : vector<2x32xf32> to vector<2x1x32xf32>
    %252 = vector.shape_cast %76 : vector<2x32xf32> to vector<2x1x32xf32>
    %253 = vector.shape_cast %105 : vector<2x32xf32> to vector<2x1x32xf32>
    %254 = vector.shape_cast %134 : vector<2x32xf32> to vector<2x1x32xf32>
    %255 = vector.shape_cast %163 : vector<2x32xf32> to vector<2x1x32xf32>
    %256 = vector.shape_cast %192 : vector<2x32xf32> to vector<2x1x32xf32>
    %257 = vector.shape_cast %221 : vector<2x32xf32> to vector<2x1x32xf32>
    %258 = vector.shape_cast %250 : vector<2x32xf32> to vector<2x1x32xf32>
    %259 = tpu.concatenate %251, %252, %253, %254, %255, %256, %257, %258 in 1 : vector<2x1x32xf32>, vector<2x1x32xf32>, vector<2x1x32xf32>, vector<2x1x32xf32>, vector<2x1x32xf32>, vector<2x1x32xf32>, vector<2x1x32xf32>, vector<2x1x32xf32> -> vector<2x8x32xf32>
    %260 = vector.shape_cast %259 : vector<2x8x32xf32> to vector<16x32xf32>
    %261 = arith.truncf %260 : vector<16x32xf32> to vector<16x32xbf16>
    %c0_48 = arith.constant 0 : index
    %c0_49 = arith.constant 0 : index
    %262 = vector.load %arg8[%c0_48, %c0_49] : memref<32x128xbf16, #tpu.memory_space<vmem>>, vector<32x128xbf16>
    %cst_50 = arith.constant dense<0.000000e+00> : vector<16x128xf32>
    %263 = tpu.matmul %261, %262, %cst_50 {dimension_numbers = #tpu.dot_dimension_numbers<[1], [0], [0], [1], [0, 0, 1, 1], [], []>} : vector<16x32xbf16>, vector<32x128xbf16>, vector<16x128xf32> -> vector<16x128xf32>
    %c0_51 = arith.constant 0 : index
    %c0_52 = arith.constant 0 : index
    %264 = vector.load %arg9[%c0_51, %c0_52] : memref<1x128xf32, #tpu.memory_space<vmem>>, vector<1x128xf32>
    %265 = vector.broadcast %264 : vector<1x128xf32> to vector<16x128xf32>
    %266 = arith.addf %263, %265 : vector<16x128xf32>
    %267 = vector.shape_cast %266 : vector<16x128xf32> to vector<2x8x128xf32>
    %c0_53 = arith.constant 0 : index
    %c0_54 = arith.constant 0 : index
    %c0_55 = arith.constant 0 : index
    %268 = vector.load %arg10[%c0_53, %c0_54, %c0_55] : memref<2x8x128xf32, #tpu.memory_space<vmem>>, vector<2x8x128xf32>
    tpu.vector_store %arg10[%c0_53, %c0_54, %c0_55], %267 {strides = array<i32>} : memref<2x8x128xf32, #tpu.memory_space<vmem>>, vector<2x8x128xf32>,
    return
  }
  func.func @transform_0(%arg0: i32) -> (i32, i32, i32) {
    %c0_i32 = arith.constant 0 : i32
    %c0_i32_0 = arith.constant 0 : i32
    %c0_i32_1 = arith.constant 0 : i32
    return %c0_i32, %arg0, %c0_i32_0 : i32, i32, i32
  }
  func.func @transform_1(%arg0: i32) -> (i32, i32) {
    %c0_i32 = arith.constant 0 : i32
    %c0_i32_0 = arith.constant 0 : i32
    %c0_i32_1 = arith.constant 0 : i32
    return %c0_i32, %c0_i32_0 : i32, i32
  }
  func.func @transform_2(%arg0: i32) -> (i32, i32) {
    %c0_i32 = arith.constant 0 : i32
    %c0_i32_0 = arith.constant 0 : i32
    %c0_i32_1 = arith.constant 0 : i32
    return %c0_i32, %c0_i32_0 : i32, i32
  }
  func.func @transform_3(%arg0: i32) -> (i32, i32) {
    %c0_i32 = arith.constant 0 : i32
    %c0_i32_0 = arith.constant 0 : i32
    %c0_i32_1 = arith.constant 0 : i32
    return %c0_i32, %c0_i32_0 : i32, i32
  }
  func.func @transform_4(%arg0: i32) -> (i32, i32) {
    %c0_i32 = arith.constant 0 : i32
    %c0_i32_0 = arith.constant 0 : i32
    %c0_i32_1 = arith.constant 0 : i32
    return %c0_i32, %c0_i32_0 : i32, i32
  }
  func.func @transform_5(%arg0: i32) -> (i32, i32) {
    %c0_i32 = arith.constant 0 : i32
    %c0_i32_0 = arith.constant 0 : i32
    %c0_i32_1 = arith.constant 0 : i32
    return %c0_i32, %c0_i32_0 : i32, i32
  }
  func.func @transform_6(%arg0: i32) -> (i32, i32) {
    %c0_i32 = arith.constant 0 : i32
    %c0_i32_0 = arith.constant 0 : i32
    %c0_i32_1 = arith.constant 0 : i32
    return %c0_i32, %c0_i32_0 : i32, i32
  }
  func.func @transform_7(%arg0: i32) -> (i32, i32) {
    %c0_i32 = arith.constant 0 : i32
    %c0_i32_0 = arith.constant 0 : i32
    %c0_i32_1 = arith.constant 0 : i32
    return %c0_i32, %c0_i32_0 : i32, i32
  }
  func.func @transform_8(%arg0: i32) -> (i32, i32) {
    %c0_i32 = arith.constant 0 : i32
    %c0_i32_0 = arith.constant 0 : i32
    %c0_i32_1 = arith.constant 0 : i32
    return %c0_i32, %c0_i32_0 : i32, i32
  }
  func.func @transform_9(%arg0: i32) -> (i32, i32, i32) {
    %c0_i32 = arith.constant 0 : i32
    %c0_i32_0 = arith.constant 0 : i32
    %c0_i32_1 = arith.constant 0 : i32
    return %arg0, %c0_i32, %c0_i32_0 : i32, i32, i32
  }
}

</mosaic_0001>

<llo_original>
// kernel: tpu_custom_call.1
$region0: #{tpu_custom_call.1}
  #allocation0 [shape = 'u32[]', space=smem, size = 0x4, offset = 0x4, fixed_abs, tag = 'smem constant byte address 0x4 - core index']
  #allocation1 [shape = 'u32[72,128]{1,0:T(1,128)}', space=vmem, size = 0x9000, scoped, tag = 'internal scratch']
  %s0 = inlined_call_operand.hbm [shape: f32[8,2,32], index: 0, kind: input, shape index: {}]
  %s1 = inlined_call_operand.hbm [shape: bf16[32,64], index: 1, kind: input, shape index: {}]
  %s2 = inlined_call_operand.vmem [shape: f32[1,64], index: 2, kind: input, shape index: {}]
  %s3 = inlined_call_operand.hbm [shape: bf16[64,96], index: 3, kind: input, shape index: {}]
  %s4 = inlined_call_operand.vmem [shape: f32[1,96], index: 4, kind: input, shape index: {}]
  %s5 = inlined_call_operand.hbm [shape: f32[32,96], index: 5, kind: input, shape index: {}]
  %s6 = inlined_call_operand.vmem [shape: f32[1,96], index: 6, kind: input, shape index: {}]
  %s7 = inlined_call_operand.hbm [shape: bf16[32,128], index: 7, kind: input, shape index: {}]
  %s8 = inlined_call_operand.vmem [shape: f32[1,128], index: 8, kind: input, shape index: {}]
  %s9 = inlined_call_operand.hbm [shape: f32[2,8,128], index: 9, kind: output, shape index: {}]
  %s10 = sld [smem:[#allocation0]]
  $region66: #{tpu_custom_call.1} parent=0
    _
  %s12 = ssub.s32 1, %s10
  %s13 = scalar_select 0, %s12, %s10
  $region1: #{tpu_custom_call.1} parent=0
    #allocation2 [shape = 'u8[8192]{0}', space=vmem, size = 0x2000, scoped, tag = 'input window, operand 0, single buffered']
    #allocation3 [shape = 's32[1]{0}', space=sflag, size = 0x4, scoped, tag = 'scoped memory for tpu_custom_call.1']
    #allocation4 [shape = 's32[1]{0}', space=sflag, size = 0x4, scoped, tag = 'scoped memory for tpu_custom_call.1']
    #allocation5 [shape = 'u8[8192]{0}', space=vmem, size = 0x2000, scoped, tag = 'input window, operand 1, single buffered']
    #allocation6 [shape = 's32[1]{0}', space=sflag, size = 0x4, scoped, tag = 'scoped memory for tpu_custom_call.1']
    #allocation7 [shape = 'u8[16384]{0}', space=vmem, size = 0x4000, scoped, tag = 'input window, operand 3, single buffered']
    #allocation8 [shape = 'u8[16384]{0}', space=vmem, size = 0x4000, scoped, tag = 'input window, operand 5, single buffered']
    #allocation9 [shape = 's32[1]{0}', space=sflag, size = 0x4, scoped, tag = 'scoped memory for tpu_custom_call.1']
    #allocation10 [shape = 'u8[8192]{0}', space=vmem, size = 0x2000, scoped, tag = 'input window, operand 7, single buffered']
    #allocation11 [shape = 'u8[8192]{0}', space=vmem, size = 0x2000, scoped, tag = 'output window, operand 0, single buffered']
    %14 = vsyncpa [#allocation3], 0
    %15 = vsyncpa [#allocation6], 0
    %16 = vsyncpa [#allocation9], 0
    %17 = vsyncpa [#allocation4], 0
    // Predicated region
    $region2: #{tpu_custom_call.1} parent=1 // pred_check
      _
    $region3: #{tpu_custom_call.1} parent=1 // pred_check_branch
      %19 = sbr.rel (0) target = $region5
    $region4: #{tpu_custom_call.1} parent=1 // pred_region
      %21 = vsyncadd [#allocation3], 0
      %s22 = sshll.u32 %s0, 4
      %s23 = int_to_ptr.hbm [resolvable:$true] %s22
      %s24 = sshll.u32 [#allocation2], 4
      %s25 = int_to_ptr.vmem [resolvable:$true] %s24
      %30 = dma.hbm_to_vmem [thread:$0]  %s23, 256, %s25, [#allocation3], 32, 32, 2
    $region5: #{tpu_custom_call.1} parent=1 // pred_fallthru
      _
    // Predicated region
    $region6: #{tpu_custom_call.1} parent=1 // pred_check
      _
    $region7: #{tpu_custom_call.1} parent=1 // pred_check_branch
      %32 = sbr.rel (0) target = $region9
    $region8: #{tpu_custom_call.1} parent=1 // pred_region
      %34 = vsyncadd [#allocation6], 0
      %s35 = sshll.u32 %s1, 4
      %s36 = int_to_ptr.hbm [resolvable:$true] %s35
      %s37 = sshll.u32 [#allocation5], 4
      %s38 = int_to_ptr.vmem [resolvable:$true] %s37
      %43 = dma.hbm_to_vmem [thread:$0]  %s36, 256, %s38, [#allocation6], 64, 64, 4
    $region9: #{tpu_custom_call.1} parent=1 // pred_fallthru
      _
    // Predicated region
    $region10: #{tpu_custom_call.1} parent=1 // pred_check
      _
    $region11: #{tpu_custom_call.1} parent=1 // pred_check_branch
      %45 = sbr.rel (0) target = $region13
    $region12: #{tpu_custom_call.1} parent=1 // pred_region
      _
    $region13: #{tpu_custom_call.1} parent=1 // pred_fallthru
      _
    // Predicated region
    $region14: #{tpu_custom_call.1} parent=1 // pred_check
      _
    $region15: #{tpu_custom_call.1} parent=1 // pred_check_branch
      %47 = sbr.rel (0) target = $region17
    $region16: #{tpu_custom_call.1} parent=1 // pred_region
      %49 = vsyncadd [#allocation6], 0
      %s50 = sshll.u32 %s3, 4
      %s51 = int_to_ptr.hbm [resolvable:$true] %s50
      %s52 = sshll.u32 [#allocation7], 4
      %s53 = int_to_ptr.vmem [resolvable:$true] %s52
      %58 = dma.hbm_to_vmem [thread:$0]  %s51, 512, %s53, [#allocation6], 64, 64, 4
    $region17: #{tpu_custom_call.1} parent=1 // pred_fallthru
      _
    // Predicated region
    $region18: #{tpu_custom_call.1} parent=1 // pred_check
      _
    $region19: #{tpu_custom_call.1} parent=1 // pred_check_branch
      %60 = sbr.rel (0) target = $region21
    $region20: #{tpu_custom_call.1} parent=1 // pred_region
      _
    $region21: #{tpu_custom_call.1} parent=1 // pred_fallthru
      _
    // Predicated region
    $region22: #{tpu_custom_call.1} parent=1 // pred_check
      _
    $region23: #{tpu_custom_call.1} parent=1 // pred_check_branch
      %62 = sbr.rel (0) target = $region25
    $region24: #{tpu_custom_call.1} parent=1 // pred_region
      %64 = vsyncadd [#allocation9], 0
      %s65 = sshll.u32 %s5, 4
      %s66 = int_to_ptr.hbm [resolvable:$true] %s65
      %s67 = sshll.u32 [#allocation8], 4
      %s68 = int_to_ptr.vmem [resolvable:$true] %s67
      %73 = dma.hbm_to_vmem [thread:$0]  %s66, 512, %s68, [#allocation9], 128, 128, 8
    $region25: #{tpu_custom_call.1} parent=1 // pred_fallthru
      _
    // Predicated region
    $region26: #{tpu_custom_call.1} parent=1 // pred_check
      _
    $region27: #{tpu_custom_call.1} parent=1 // pred_check_branch
      %75 = sbr.rel (0) target = $region29
    $region28: #{tpu_custom_call.1} parent=1 // pred_region
      _
    $region29: #{tpu_custom_call.1} parent=1 // pred_fallthru
      _
    // Predicated region
    $region30: #{tpu_custom_call.1} parent=1 // pred_check
      _
    $region31: #{tpu_custom_call.1} parent=1 // pred_check_branch
      %77 = sbr.rel (0) target = $region33
    $region32: #{tpu_custom_call.1} parent=1 // pred_region
      %79 = vsyncadd [#allocation9], 0
      %s80 = sshll.u32 %s7, 4
      %s81 = int_to_ptr.hbm [resolvable:$true] %s80
      %s82 = sshll.u32 [#allocation10], 4
      %s83 = int_to_ptr.vmem [resolvable:$true] %s82
      %88 = dma.hbm_to_vmem [thread:$0]  %s81, 256, %s83, [#allocation9], 64, 64, 4
    $region33: #{tpu_custom_call.1} parent=1 // pred_fallthru
      _
    // Predicated region
    $region34: #{tpu_custom_call.1} parent=1 // pred_check
      _
    $region35: #{tpu_custom_call.1} parent=1 // pred_check_branch
      %90 = sbr.rel (0) target = $region37
    $region36: #{tpu_custom_call.1} parent=1 // pred_region
      _
    $region37: #{tpu_custom_call.1} parent=1 // pred_fallthru
      _
    // Predicated region
    $region38: #{tpu_custom_call.1} parent=1 // pred_check
      _
    $region39: #{tpu_custom_call.1} parent=1 // pred_check_branch
      %92 = sbr.rel (0) target = $region41
    $region40: #{tpu_custom_call.1} parent=1 // pred_region
      %94 = dma.done [#allocation3], 256
    $region41: #{tpu_custom_call.1} parent=1 // pred_fallthru
      _
    // Predicated region
    $region42: #{tpu_custom_call.1} parent=1 // pred_check
      _
    $region43: #{tpu_custom_call.1} parent=1 // pred_check_branch
      %96 = sbr.rel (0) target = $region45
    $region44: #{tpu_custom_call.1} parent=1 // pred_region
      %98 = dma.done [#allocation6], 256
    $region45: #{tpu_custom_call.1} parent=1 // pred_fallthru
      _
    // Predicated region
    $region46: #{tpu_custom_call.1} parent=1 // pred_check
      _
    $region47: #{tpu_custom_call.1} parent=1 // pred_check_branch
      %100 = sbr.rel (0) target = $region49
    $region48: #{tpu_custom_call.1} parent=1 // pred_region
      %102 = dma.done [#allocation6], 512
    $region49: #{tpu_custom_call.1} parent=1 // pred_fallthru
      _
    // Predicated region
    $region50: #{tpu_custom_call.1} parent=1 // pred_check
      _
    $region51: #{tpu_custom_call.1} parent=1 // pred_check_branch
      %104 = sbr.rel (0) target = $region53
    $region52: #{tpu_custom_call.1} parent=1 // pred_region
      %106 = dma.done [#allocation9], 512
    $region53: #{tpu_custom_call.1} parent=1 // pred_fallthru
      _
    // Predicated region
    $region54: #{tpu_custom_call.1} parent=1 // pred_check
      _
    $region55: #{tpu_custom_call.1} parent=1 // pred_check_branch
      %108 = sbr.rel (0) target = $region57
    $region56: #{tpu_custom_call.1} parent=1 // pred_region
      %110 = dma.done [#allocation9], 256
    $region57: #{tpu_custom_call.1} parent=1 // pred_fallthru
      _
    %v112 = vld [vmem:[#allocation2] sm:$0x3]
    %v113 = vld [vmem:[#allocation2 + $0x2] sm:$0x3]
    %v114 = vld [vmem:[#allocation2 + $0x4] sm:$0x3]
    %v115 = vld [vmem:[#allocation2 + $0x6] sm:$0x3]
    %v116 = vld [vmem:[#allocation2 + $0x8] sm:$0x3]
    %v117 = vld [vmem:[#allocation2 + $0xa] sm:$0x3]
    %v118 = vld [vmem:[#allocation2 + $0xc] sm:$0x3]
    %v119 = vld [vmem:[#allocation2 + $0xe] sm:$0x3]
    %128 = vst [vmem:[#allocation1] ss:$4 sm:$0xff] %v112
    %s129 = scalar_lea.vmem [#allocation1], 1
    %130 = vst [vmem:[%s129] ss:$4 sm:$0xff] %v113
    %s131 = scalar_lea.vmem [#allocation1], 2
    %132 = vst [vmem:[%s131] ss:$4 sm:$0xff] %v114
    %s133 = scalar_lea.vmem [#allocation1], 3
    %134 = vst [vmem:[%s133] ss:$4 sm:$0xff] %v115
    %s135 = scalar_lea.vmem [#allocation1], 32
    %136 = vst [vmem:[%s135] ss:$4 sm:$0xff] %v116
    %s137 = scalar_lea.vmem [#allocation1], 33
    %138 = vst [vmem:[%s137] ss:$4 sm:$0xff] %v117
    %s139 = scalar_lea.vmem [#allocation1], 34
    %140 = vst [vmem:[%s139] ss:$4 sm:$0xff] %v118
    %s141 = scalar_lea.vmem [#allocation1], 35
    %142 = vst [vmem:[%s141] ss:$4 sm:$0xff] %v119
    %v143 = vld.sshfl [vmem:[#allocation1] sm:$0xff pattern:$0x73625140]
    %v144 = vld.sshfl [vmem:[#allocation1 + $0x20] sm:$0xff pattern:$0x73625140]
    %v147 = vpack.c.bf16 %v144, %v143
    %v148 = vld [vmem:[#allocation5] sm:$0xf]
    %v149 = vld [vmem:[#allocation5 + $0x4] sm:$0xf]
    %v150 = vld [vmem:[#allocation5 + $0x8] sm:$0xf]
    %v151 = vld [vmem:[#allocation5 + $0xc] sm:$0xf]
    %v152 = vld [vmem:[%s2] sm:$0x1]
    %v154 = vperm.slane %v152, 0
    %v160 = vunpack.c.l.b16 %v148
    %v161 = vunpack.c.l.b16 %v149
    %v162 = vunpack.c.l.b16 %v150
    %v163 = vunpack.c.l.b16 %v151
    %v164 = vpack.c.b16 %v161, %v160
    %v165 = vpack.c.b16 %v163, %v162
    %vm168 = vcmask 261120
    %v170 = vsel %vm168, %v147, 0
    %172 = vmatpush.bf16.msra.mxu0 0
    %173 = vmatpush.bf16.msra.mxu0 0
    %174 = vmatpush.bf16.msra.mxu0 0
    %175 = vmatpush.bf16.msra.mxu0 0
    %176 = vmatpush.bf16.msra.mxu0 0
    %177 = vmatpush.bf16.msra.mxu0 0
    %178 = vmatpush.bf16.msra.mxu0 %v165
    %179 = vmatpush.bf16.msra.mxu0 %v164
    %180 = vmatmul.bf16.gmra.mxu0 %v170
    %v181 = vpop.f32.mrf.mxu0
    %v182 = vadd.f32 %v154, %v181
    %v183 = vpop.f32.mrf.mxu0
    %v184 = vadd.f32 %v154, %v183
    %185 = vdwg.mxu0
    %v186 = vpack.c.bf16 %v184, %v182
    %v187 = vld [vmem:[#allocation7] sm:$0xf]
    %v188 = vld [vmem:[#allocation7 + $0x4] sm:$0xf]
    %v189 = vld [vmem:[#allocation7 + $0x8] sm:$0xf]
    %v190 = vld [vmem:[#allocation7 + $0xc] sm:$0xf]
    %v191 = vld [vmem:[#allocation7 + $0x10] sm:$0xf]
    %v192 = vld [vmem:[#allocation7 + $0x14] sm:$0xf]
    %v193 = vld [vmem:[#allocation7 + $0x18] sm:$0xf]
    %v194 = vld [vmem:[#allocation7 + $0x1c] sm:$0xf]
    %v195 = vld [vmem:[%s4] sm:$0x1]
    %v197 = vperm.slane %v195, 0
    %v207 = vunpack.c.l.b16 %v187
    %v208 = vunpack.c.l.b16 %v188
    %v209 = vunpack.c.l.b16 %v189
    %v210 = vunpack.c.l.b16 %v190
    %v211 = vunpack.c.l.b16 %v191
    %v212 = vunpack.c.l.b16 %v192
    %v213 = vunpack.c.l.b16 %v193
    %v214 = vunpack.c.l.b16 %v194
    %v215 = vpack.c.b16 %v208, %v207
    %v216 = vpack.c.b16 %v210, %v209
    %v217 = vpack.c.b16 %v212, %v211
    %v218 = vpack.c.b16 %v214, %v213
    %vm223 = vcmask 523264
    %v225 = vsel %vm223, %v186, 0
    %227 = vmatpush.bf16.msra.mxu0 0
    %228 = vmatpush.bf16.msra.mxu0 0
    %229 = vmatpush.bf16.msra.mxu0 0
    %230 = vmatpush.bf16.msra.mxu0 0
    %231 = vmatpush.bf16.msra.mxu0 %v218
    %232 = vmatpush.bf16.msra.mxu0 %v217
    %233 = vmatpush.bf16.msra.mxu0 %v216
    %234 = vmatpush.bf16.msra.mxu0 %v215
    %235 = vmatmul.bf16.gmra.mxu0 %v225
    %v236 = vpop.f32.mrf.mxu0
    %v237 = vadd.f32 %v197, %v236
    %v238 = vpop.f32.mrf.mxu0
    %v239 = vadd.f32 %v197, %v238
    %240 = vdwg.mxu0
    %v241 = vld [vmem:[#allocation8] sm:$0xff]
    %v242 = vld [vmem:[#allocation8 + $0x8] sm:$0xff]
    %v243 = vld [vmem:[#allocation8 + $0x10] sm:$0xff]
    %v244 = vld [vmem:[#allocation8 + $0x18] sm:$0xff]
    %v245 = vld [vmem:[%s6] sm:$0x1]
    %v247 = vperm.slane %v245, 0
    %v250 = vsel %vm168, 0.0, 0
    %252 = vmatpush.msra.mxu0 0.0
    %253 = vmatpush.msra.mxu0 0.0
    %254 = vmatpush.msra.mxu0 0.0
    %255 = vmatpush.msra.mxu0 0.0
    %256 = vmatpush.msra.mxu0 0.0
    %257 = vmatpush.msra.mxu0 0.0
    %258 = vmatpush.msra.mxu0 0.0
    %259 = vmatpush.msra.mxu0 0.0
    %260 = vmatpush.msra.mxu0 0.0
    %261 = vmatpush.msra.mxu0 0.0
    %262 = vmatpush.msra.mxu0 0.0
    %263 = vmatpush.msra.mxu0 0.0
    %264 = vmatpush.msra.mxu0 %v244
    %265 = vmatpush.msra.mxu0 %v243
    %266 = vmatpush.msra.mxu0 %v242
    %267 = vmatpush.msra.mxu0 %v241
    %268 = vmatmul.f32.gmra.mxu0 %v250
    %v269 = vpop.f32.mrf.mxu0
    %v270 = vadd.f32 %v247, %v269
    %271 = vdwg.mxu0
    %v272 = vadd.f32 %v237, %v270
    %v273 = vxor.u32 %v272, 2147483648
    %v274 = vmul.f32 %v273, 1.442695
    %v275 = vpow.pop %v274
    %v276 = vadd.f32 %v275, 1.0
    %v277 = vrcp.pop %v276
    %v278 = vmul.f32 %v276, %v277
    %v279 = vsub.f32 1.0, %v278
    %v280 = vmul.f32 %v277, %v279
    %v281 = vadd.f32 %v277, %v280
    %vm282 = vweird.f32 %v276
    %vm283 = vweird.f32 %v277
    %vm284 = vmor %vm282, %vm283
    %v285 = vsel %vm284, %v277, %v281
    %v286 = vand.u32 2147483647, %v276
    %vm287 = vcmp.eq.f32.partialorder %v286, 8.507059e+37
    %v288 = vand.u32 %v276, 2147483648
    %v289 = vor.u32 1.1754944e-38, %v288
    %v290 = vsel %vm287, %v289, %v285
    %v291 = vmul.f32 1.0, %v290
    %293 = vrot.lane.b32.xlu0 %v270, 64
    %v294 = vpop.permute.xlu0 %293
    %v296 = vmul.f32 %v291, %v294
    %298 = vrot.lane.b32.xlu0 %v296, 64
    %v299 = vpop.permute.xlu0 %298
    %v301 = vadd.f32 %v237, %v299
    %v302 = vtanh.pop %v301
    %v303 = vsub.f32 1.0, %v291
    %305 = vrot.lane.b32.xlu0 %v302, 96
    %v306 = vpop.permute.xlu0 %305
    %v308 = vmul.f32 %v303, %v306
    %v309 = vmul.f32 %v291, 0.0
    %v310 = vadd.f32 %v308, %v309
    %312 = vrot.lane.b32.xlu0 %v310, 96
    %v313 = vpop.permute.xlu0 %312
    %v314 = vsel %vm168, %v313, 0
    %316 = vmatpush.msra.mxu0 0.0
    %317 = vmatpush.msra.mxu0 0.0
    %318 = vmatpush.msra.mxu0 0.0
    %319 = vmatpush.msra.mxu0 0.0
    %320 = vmatpush.msra.mxu0 0.0
    %321 = vmatpush.msra.mxu0 0.0
    %322 = vmatpush.msra.mxu0 0.0
    %323 = vmatpush.msra.mxu0 0.0
    %324 = vmatpush.msra.mxu0 0.0
    %325 = vmatpush.msra.mxu0 0.0
    %326 = vmatpush.msra.mxu0 0.0
    %327 = vmatpush.msra.mxu0 0.0
    %328 = vmatpush.msra.mxu0 %v244
    %329 = vmatpush.msra.mxu0 %v243
    %330 = vmatpush.msra.mxu0 %v242
    %331 = vmatpush.msra.mxu0 %v241
    %332 = vmatmul.f32.gmra.mxu0 %v314
    %v333 = vpop.f32.mrf.mxu0
    %v334 = vadd.f32 %v247, %v333
    %335 = vdwg.mxu0
    %v337 = vrot.slane %v334, 6
    %v339 = vadd.f32 %v237, %v337
    %v340 = vxor.u32 %v339, 2147483648
    %v341 = vmul.f32 %v340, 1.442695
    %v342 = vpow.pop %v341
    %v343 = vadd.f32 %v342, 1.0
    %v344 = vrcp.pop %v343
    %v345 = vmul.f32 %v343, %v344
    %v346 = vsub.f32 1.0, %v345
    %v347 = vmul.f32 %v344, %v346
    %v348 = vadd.f32 %v344, %v347
    %vm349 = vweird.f32 %v343
    %vm350 = vweird.f32 %v344
    %vm351 = vmor %vm349, %vm350
    %v352 = vsel %vm351, %v344, %v348
    %v353 = vand.u32 2147483647, %v343
    %vm354 = vcmp.eq.f32.partialorder %v353, 8.507059e+37
    %v355 = vand.u32 %v343, 2147483648
    %v356 = vor.u32 1.1754944e-38, %v355
    %v357 = vsel %vm354, %v356, %v352
    %v358 = vmul.f32 1.0, %v357
    %359 = vrot.lane.b32.xlu0 %v337, 64
    %v360 = vpop.permute.xlu0 %359
    %v362 = vmul.f32 %v358, %v360
    %364 = vrot.lane.b32.xlu0 %v362, 64
    %v365 = vpop.permute.xlu0 %364
    %v367 = vadd.f32 %v237, %v365
    %v368 = vtanh.pop %v367
    %v369 = vsub.f32 1.0, %v358
    %371 = vrot.lane.b32.xlu0 %v368, 96
    %v372 = vpop.permute.xlu0 %371
    %v374 = vmul.f32 %v369, %v372
    %v375 = vrot.slane %v310, 6
    %v377 = vmul.f32 %v358, %v375
    %v378 = vadd.f32 %v374, %v377
    %v380 = vrot.slane %v378, 2
    %381 = vrot.lane.b32.xlu0 %v380, 96
    %v382 = vpop.permute.xlu0 %381
    %v383 = vsel %vm168, %v382, 0
    %385 = vmatpush.msra.mxu0 0.0
    %386 = vmatpush.msra.mxu0 0.0
    %387 = vmatpush.msra.mxu0 0.0
    %388 = vmatpush.msra.mxu0 0.0
    %389 = vmatpush.msra.mxu0 0.0
    %390 = vmatpush.msra.mxu0 0.0
    %391 = vmatpush.msra.mxu0 0.0
    %392 = vmatpush.msra.mxu0 0.0
    %393 = vmatpush.msra.mxu0 0.0
    %394 = vmatpush.msra.mxu0 0.0
    %395 = vmatpush.msra.mxu0 0.0
    %396 = vmatpush.msra.mxu0 0.0
    %397 = vmatpush.msra.mxu0 %v244
    %398 = vmatpush.msra.mxu0 %v243
    %399 = vmatpush.msra.mxu0 %v242
    %400 = vmatpush.msra.mxu0 %v241
    %401 = vmatmul.f32.gmra.mxu0 %v383
    %v402 = vpop.f32.mrf.mxu0
    %v403 = vadd.f32 %v247, %v402
    %404 = vdwg.mxu0
    %v406 = vrot.slane %v403, 4
    %v408 = vadd.f32 %v237, %v406
    %v409 = vxor.u32 %v408, 2147483648
    %v410 = vmul.f32 %v409, 1.442695
    %v411 = vpow.pop %v410
    %v412 = vadd.f32 %v411, 1.0
    %v413 = vrcp.pop %v412
    %v414 = vmul.f32 %v412, %v413
    %v415 = vsub.f32 1.0, %v414
    %v416 = vmul.f32 %v413, %v415
    %v417 = vadd.f32 %v413, %v416
    %vm418 = vweird.f32 %v412
    %vm419 = vweird.f32 %v413
    %vm420 = vmor %vm418, %vm419
    %v421 = vsel %vm420, %v413, %v417
    %v422 = vand.u32 2147483647, %v412
    %vm423 = vcmp.eq.f32.partialorder %v422, 8.507059e+37
    %v424 = vand.u32 %v412, 2147483648
    %v425 = vor.u32 1.1754944e-38, %v424
    %v426 = vsel %vm423, %v425, %v421
    %v427 = vmul.f32 1.0, %v426
    %428 = vrot.lane.b32.xlu0 %v406, 64
    %v429 = vpop.permute.xlu0 %428
    %v431 = vmul.f32 %v427, %v429
    %433 = vrot.lane.b32.xlu0 %v431, 64
    %v434 = vpop.permute.xlu0 %433
    %v436 = vadd.f32 %v237, %v434
    %v437 = vtanh.pop %v436
    %v438 = vsub.f32 1.0, %v427
    %440 = vrot.lane.b32.xlu0 %v437, 96
    %v441 = vpop.permute.xlu0 %440
    %v443 = vmul.f32 %v438, %v441
    %v444 = vrot.slane %v378, 6
    %v446 = vmul.f32 %v427, %v444
    %v447 = vadd.f32 %v443, %v446
    %v449 = vrot.slane %v447, 4
    %450 = vrot.lane.b32.xlu0 %v449, 96
    %v451 = vpop.permute.xlu0 %450
    %v452 = vsel %vm168, %v451, 0
    %454 = vmatpush.msra.mxu0 0.0
    %455 = vmatpush.msra.mxu0 0.0
    %456 = vmatpush.msra.mxu0 0.0
    %457 = vmatpush.msra.mxu0 0.0
    %458 = vmatpush.msra.mxu0 0.0
    %459 = vmatpush.msra.mxu0 0.0
    %460 = vmatpush.msra.mxu0 0.0
    %461 = vmatpush.msra.mxu0 0.0
    %462 = vmatpush.msra.mxu0 0.0
    %463 = vmatpush.msra.mxu0 0.0
    %464 = vmatpush.msra.mxu0 0.0
    %465 = vmatpush.msra.mxu0 0.0
    %466 = vmatpush.msra.mxu0 %v244
    %467 = vmatpush.msra.mxu0 %v243
    %468 = vmatpush.msra.mxu0 %v242
    %469 = vmatpush.msra.mxu0 %v241
    %470 = vmatmul.f32.gmra.mxu0 %v452
    %v471 = vpop.f32.mrf.mxu0
    %v472 = vadd.f32 %v247, %v471
    %473 = vdwg.mxu0
    %v475 = vrot.slane %v472, 2
    %v477 = vadd.f32 %v237, %v475
    %v478 = vxor.u32 %v477, 2147483648
    %v479 = vmul.f32 %v478, 1.442695
    %v480 = vpow.pop %v479
    %v481 = vadd.f32 %v480, 1.0
    %v482 = vrcp.pop %v481
    %v483 = vmul.f32 %v481, %v482
    %v484 = vsub.f32 1.0, %v483
    %v485 = vmul.f32 %v482, %v484
    %v486 = vadd.f32 %v482, %v485
    %vm487 = vweird.f32 %v481
    %vm488 = vweird.f32 %v482
    %vm489 = vmor %vm487, %vm488
    %v490 = vsel %vm489, %v482, %v486
    %v491 = vand.u32 2147483647, %v481
    %vm492 = vcmp.eq.f32.partialorder %v491, 8.507059e+37
    %v493 = vand.u32 %v481, 2147483648
    %v494 = vor.u32 1.1754944e-38, %v493
    %v495 = vsel %vm492, %v494, %v490
    %v496 = vmul.f32 1.0, %v495
    %497 = vrot.lane.b32.xlu0 %v475, 64
    %v498 = vpop.permute.xlu0 %497
    %v500 = vmul.f32 %v496, %v498
    %502 = vrot.lane.b32.xlu0 %v500, 64
    %v503 = vpop.permute.xlu0 %502
    %v505 = vadd.f32 %v237, %v503
    %v506 = vtanh.pop %v505
    %v507 = vsub.f32 1.0, %v496
    %509 = vrot.lane.b32.xlu0 %v506, 96
    %v510 = vpop.permute.xlu0 %509
    %v512 = vmul.f32 %v507, %v510
    %v513 = vrot.slane %v447, 6
    %v515 = vmul.f32 %v496, %v513
    %v516 = vadd.f32 %v512, %v515
    %v518 = vrot.slane %v516, 6
    %519 = vrot.lane.b32.xlu0 %v518, 96
    %v520 = vpop.permute.xlu0 %519
    %v521 = vsel %vm168, %v520, 0
    %523 = vmatpush.msra.mxu0 0.0
    %524 = vmatpush.msra.mxu0 0.0
    %525 = vmatpush.msra.mxu0 0.0
    %526 = vmatpush.msra.mxu0 0.0
    %527 = vmatpush.msra.mxu0 0.0
    %528 = vmatpush.msra.mxu0 0.0
    %529 = vmatpush.msra.mxu0 0.0
    %530 = vmatpush.msra.mxu0 0.0
    %531 = vmatpush.msra.mxu0 0.0
    %532 = vmatpush.msra.mxu0 0.0
    %533 = vmatpush.msra.mxu0 0.0
    %534 = vmatpush.msra.mxu0 0.0
    %535 = vmatpush.msra.mxu0 %v244
    %536 = vmatpush.msra.mxu0 %v243
    %537 = vmatpush.msra.mxu0 %v242
    %538 = vmatpush.msra.mxu0 %v241
    %539 = vmatmul.f32.gmra.mxu0 %v521
    %v540 = vpop.f32.mrf.mxu0
    %v541 = vadd.f32 %v247, %v540
    %542 = vdwg.mxu0
    %v543 = vadd.f32 %v239, %v541
    %v544 = vxor.u32 %v543, 2147483648
    %v545 = vmul.f32 %v544, 1.442695
    %v546 = vpow.pop %v545
    %v547 = vadd.f32 %v546, 1.0
    %v548 = vrcp.pop %v547
    %v549 = vmul.f32 %v547, %v548
    %v550 = vsub.f32 1.0, %v549
    %v551 = vmul.f32 %v548, %v550
    %v552 = vadd.f32 %v548, %v551
    %vm553 = vweird.f32 %v547
    %vm554 = vweird.f32 %v548
    %vm555 = vmor %vm553, %vm554
    %v556 = vsel %vm555, %v548, %v552
    %v557 = vand.u32 2147483647, %v547
    %vm558 = vcmp.eq.f32.partialorder %v557, 8.507059e+37
    %v559 = vand.u32 %v547, 2147483648
    %v560 = vor.u32 1.1754944e-38, %v559
    %v561 = vsel %vm558, %v560, %v556
    %v562 = vmul.f32 1.0, %v561
    %564 = vrot.lane.b32.xlu0 %v541, 64
    %v565 = vpop.permute.xlu0 %564
    %v567 = vmul.f32 %v562, %v565
    %569 = vrot.lane.b32.xlu0 %v567, 64
    %v570 = vpop.permute.xlu0 %569
    %v572 = vadd.f32 %v239, %v570
    %v573 = vtanh.pop %v572
    %v574 = vsub.f32 1.0, %v562
    %576 = vrot.lane.b32.xlu0 %v573, 96
    %v577 = vpop.permute.xlu0 %576
    %v579 = vmul.f32 %v574, %v577
    %v581 = vmul.f32 %v562, %v518
    %v582 = vadd.f32 %v579, %v581
    %584 = vrot.lane.b32.xlu0 %v582, 96
    %v585 = vpop.permute.xlu0 %584
    %v586 = vsel %vm168, %v585, 0
    %588 = vmatpush.msra.mxu0 0.0
    %589 = vmatpush.msra.mxu0 0.0
    %590 = vmatpush.msra.mxu0 0.0
    %591 = vmatpush.msra.mxu0 0.0
    %592 = vmatpush.msra.mxu0 0.0
    %593 = vmatpush.msra.mxu0 0.0
    %594 = vmatpush.msra.mxu0 0.0
    %595 = vmatpush.msra.mxu0 0.0
    %596 = vmatpush.msra.mxu0 0.0
    %597 = vmatpush.msra.mxu0 0.0
    %598 = vmatpush.msra.mxu0 0.0
    %599 = vmatpush.msra.mxu0 0.0
    %600 = vmatpush.msra.mxu0 %v244
    %601 = vmatpush.msra.mxu0 %v243
    %602 = vmatpush.msra.mxu0 %v242
    %603 = vmatpush.msra.mxu0 %v241
    %604 = vmatmul.f32.gmra.mxu0 %v586
    %v605 = vpop.f32.mrf.mxu0
    %v606 = vadd.f32 %v247, %v605
    %607 = vdwg.mxu0
    %v609 = vrot.slane %v606, 6
    %v611 = vadd.f32 %v239, %v609
    %v612 = vxor.u32 %v611, 2147483648
    %v613 = vmul.f32 %v612, 1.442695
    %v614 = vpow.pop %v613
    %v615 = vadd.f32 %v614, 1.0
    %v616 = vrcp.pop %v615
    %v617 = vmul.f32 %v615, %v616
    %v618 = vsub.f32 1.0, %v617
    %v619 = vmul.f32 %v616, %v618
    %v620 = vadd.f32 %v616, %v619
    %vm621 = vweird.f32 %v615
    %vm622 = vweird.f32 %v616
    %vm623 = vmor %vm621, %vm622
    %v624 = vsel %vm623, %v616, %v620
    %v625 = vand.u32 2147483647, %v615
    %vm626 = vcmp.eq.f32.partialorder %v625, 8.507059e+37
    %v627 = vand.u32 %v615, 2147483648
    %v628 = vor.u32 1.1754944e-38, %v627
    %v629 = vsel %vm626, %v628, %v624
    %v630 = vmul.f32 1.0, %v629
    %631 = vrot.lane.b32.xlu0 %v609, 64
    %v632 = vpop.permute.xlu0 %631
    %v634 = vmul.f32 %v630, %v632
    %636 = vrot.lane.b32.xlu0 %v634, 64
    %v637 = vpop.permute.xlu0 %636
    %v639 = vadd.f32 %v239, %v637
    %v640 = vtanh.pop %v639
    %v641 = vsub.f32 1.0, %v630
    %643 = vrot.lane.b32.xlu0 %v640, 96
    %v644 = vpop.permute.xlu0 %643
    %v646 = vmul.f32 %v641, %v644
    %v647 = vrot.slane %v582, 6
    %v649 = vmul.f32 %v630, %v647
    %v650 = vadd.f32 %v646, %v649
    %v652 = vrot.slane %v650, 2
    %653 = vrot.lane.b32.xlu0 %v652, 96
    %v654 = vpop.permute.xlu0 %653
    %v655 = vsel %vm168, %v654, 0
    %657 = vmatpush.msra.mxu0 0.0
    %658 = vmatpush.msra.mxu0 0.0
    %659 = vmatpush.msra.mxu0 0.0
    %660 = vmatpush.msra.mxu0 0.0
    %661 = vmatpush.msra.mxu0 0.0
    %662 = vmatpush.msra.mxu0 0.0
    %663 = vmatpush.msra.mxu0 0.0
    %664 = vmatpush.msra.mxu0 0.0
    %665 = vmatpush.msra.mxu0 0.0
    %666 = vmatpush.msra.mxu0 0.0
    %667 = vmatpush.msra.mxu0 0.0
    %668 = vmatpush.msra.mxu0 0.0
    %669 = vmatpush.msra.mxu0 %v244
    %670 = vmatpush.msra.mxu0 %v243
    %671 = vmatpush.msra.mxu0 %v242
    %672 = vmatpush.msra.mxu0 %v241
    %673 = vmatmul.f32.gmra.mxu0 %v655
    %v674 = vpop.f32.mrf.mxu0
    %v675 = vadd.f32 %v247, %v674
    %676 = vdwg.mxu0
    %v678 = vrot.slane %v675, 4
    %v680 = vadd.f32 %v239, %v678
    %v681 = vxor.u32 %v680, 2147483648
    %v682 = vmul.f32 %v681, 1.442695
    %v683 = vpow.pop %v682
    %v684 = vadd.f32 %v683, 1.0
    %v685 = vrcp.pop %v684
    %v686 = vmul.f32 %v684, %v685
    %v687 = vsub.f32 1.0, %v686
    %v688 = vmul.f32 %v685, %v687
    %v689 = vadd.f32 %v685, %v688
    %vm690 = vweird.f32 %v684
    %vm691 = vweird.f32 %v685
    %vm692 = vmor %vm690, %vm691
    %v693 = vsel %vm692, %v685, %v689
    %v694 = vand.u32 2147483647, %v684
    %vm695 = vcmp.eq.f32.partialorder %v694, 8.507059e+37
    %v696 = vand.u32 %v684, 2147483648
    %v697 = vor.u32 1.1754944e-38, %v696
    %v698 = vsel %vm695, %v697, %v693
    %v699 = vmul.f32 1.0, %v698
    %700 = vrot.lane.b32.xlu0 %v678, 64
    %v701 = vpop.permute.xlu0 %700
    %v703 = vmul.f32 %v699, %v701
    %705 = vrot.lane.b32.xlu0 %v703, 64
    %v706 = vpop.permute.xlu0 %705
    %v708 = vadd.f32 %v239, %v706
    %v709 = vtanh.pop %v708
    %v710 = vsub.f32 1.0, %v699
    %712 = vrot.lane.b32.xlu0 %v709, 96
    %v713 = vpop.permute.xlu0 %712
    %v715 = vmul.f32 %v710, %v713
    %v716 = vrot.slane %v650, 6
    %v718 = vmul.f32 %v699, %v716
    %v719 = vadd.f32 %v715, %v718
    %v721 = vrot.slane %v719, 4
    %722 = vrot.lane.b32.xlu0 %v721, 96
    %v723 = vpop.permute.xlu0 %722
    %v724 = vsel %vm168, %v723, 0
    %726 = vmatpush.msra.mxu0 0.0
    %727 = vmatpush.msra.mxu0 0.0
    %728 = vmatpush.msra.mxu0 0.0
    %729 = vmatpush.msra.mxu0 0.0
    %730 = vmatpush.msra.mxu0 0.0
    %731 = vmatpush.msra.mxu0 0.0
    %732 = vmatpush.msra.mxu0 0.0
    %733 = vmatpush.msra.mxu0 0.0
    %734 = vmatpush.msra.mxu0 0.0
    %735 = vmatpush.msra.mxu0 0.0
    %736 = vmatpush.msra.mxu0 0.0
    %737 = vmatpush.msra.mxu0 0.0
    %738 = vmatpush.msra.mxu0 %v244
    %739 = vmatpush.msra.mxu0 %v243
    %740 = vmatpush.msra.mxu0 %v242
    %741 = vmatpush.msra.mxu0 %v241
    %742 = vmatmul.f32.gmra.mxu0 %v724
    %v743 = vpop.f32.mrf.mxu0
    %v744 = vadd.f32 %v247, %v743
    %745 = vdwg.mxu0
    %v747 = vrot.slane %v744, 2
    %v749 = vadd.f32 %v239, %v747
    %v750 = vxor.u32 %v749, 2147483648
    %v751 = vmul.f32 %v750, 1.442695
    %v752 = vpow.pop %v751
    %v753 = vadd.f32 %v752, 1.0
    %v754 = vrcp.pop %v753
    %v755 = vmul.f32 %v753, %v754
    %v756 = vsub.f32 1.0, %v755
    %v757 = vmul.f32 %v754, %v756
    %v758 = vadd.f32 %v754, %v757
    %vm759 = vweird.f32 %v753
    %vm760 = vweird.f32 %v754
    %vm761 = vmor %vm759, %vm760
    %v762 = vsel %vm761, %v754, %v758
    %v763 = vand.u32 2147483647, %v753
    %vm764 = vcmp.eq.f32.partialorder %v763, 8.507059e+37
    %v765 = vand.u32 %v753, 2147483648
    %v766 = vor.u32 1.1754944e-38, %v765
    %v767 = vsel %vm764, %v766, %v762
    %v768 = vmul.f32 1.0, %v767
    %769 = vrot.lane.b32.xlu0 %v747, 64
    %v770 = vpop.permute.xlu0 %769
    %v772 = vmul.f32 %v768, %v770
    %774 = vrot.lane.b32.xlu0 %v772, 64
    %v775 = vpop.permute.xlu0 %774
    %v777 = vadd.f32 %v239, %v775
    %v778 = vtanh.pop %v777
    %v779 = vsub.f32 1.0, %v768
    %781 = vrot.lane.b32.xlu0 %v778, 96
    %v782 = vpop.permute.xlu0 %781
    %v784 = vmul.f32 %v779, %v782
    %v785 = vrot.slane %v719, 6
    %v787 = vmul.f32 %v768, %v785
    %v788 = vadd.f32 %v784, %v787
    %v789 = vrot.slane %v310, 1
    %791 = vst [vmem:[#allocation1] sm:$0xff] %v378
    %s792 = scalar_lea.vmem [#allocation1], 2
    %v793 = vld [vmem:[%s792] ss:$9 sm:$0xff]
    %s794 = scalar_lea.vmem [#allocation1], 3
    %v795 = vld [vmem:[%s794] ss:$9 sm:$0xff]
    %796 = vst [vmem:[#allocation1] sm:$0xff] %v447
    %s797 = scalar_lea.vmem [#allocation1], 4
    %v798 = vld [vmem:[%s797] ss:$9 sm:$0xff]
    %s799 = scalar_lea.vmem [#allocation1], 5
    %v800 = vld [vmem:[%s799] ss:$9 sm:$0xff]
    %801 = vst [vmem:[#allocation1] sm:$0xff] %v516
    %s802 = scalar_lea.vmem [#allocation1], 6
    %v803 = vld [vmem:[%s802] ss:$9 sm:$0xff]
    %s804 = scalar_lea.vmem [#allocation1], 7
    %v805 = vld [vmem:[%s804] ss:$9 sm:$0xff]
    %v806 = vrot.slane %v582, 1
    %807 = vst [vmem:[#allocation1] sm:$0xff] %v650
    %s808 = scalar_lea.vmem [#allocation1], 2
    %v809 = vld [vmem:[%s808] ss:$9 sm:$0xff]
    %s810 = scalar_lea.vmem [#allocation1], 3
    %v811 = vld [vmem:[%s810] ss:$9 sm:$0xff]
    %812 = vst [vmem:[#allocation1] sm:$0xff] %v719
    %s813 = scalar_lea.vmem [#allocation1], 4
    %v814 = vld [vmem:[%s813] ss:$9 sm:$0xff]
    %s815 = scalar_lea.vmem [#allocation1], 5
    %v816 = vld [vmem:[%s815] ss:$9 sm:$0xff]
    %818 = vst [vmem:[#allocation1] sm:$0xff] %v788
    %s819 = scalar_lea.vmem [#allocation1], 6
    %v820 = vld [vmem:[%s819] ss:$9 sm:$0xff]
    %s821 = scalar_lea.vmem [#allocation1], 7
    %v822 = vld [vmem:[%s821] ss:$9 sm:$0xff]
    %v823 = vperm.slane %v793, 0
    %v824 = vperm.slane %v795, 0
    %v827 = vperm.slane %v798, 0
    %v828 = vperm.slane %v800, 0
    %v831 = vperm.slane %v803, 0
    %v832 = vperm.slane %v805, 0
    %v835 = vperm.slane %v582, 0
    %v836 = vperm.slane %v806, 0
    %v839 = vperm.slane %v809, 0
    %v840 = vperm.slane %v811, 0
    %v843 = vperm.slane %v814, 0
    %v844 = vperm.slane %v816, 0
    %v847 = vperm.slane %v820, 0
    %v848 = vperm.slane %v822, 0
    %vm851 = vcmask 1040384
    %v852 = vsel %vm851, %v310, %v823
    %v853 = vsel %vm851, %v789, %v824
    %vm854 = vcmask 1041408
    %v855 = vsel %vm854, %v852, %v827
    %v856 = vsel %vm854, %v853, %v828
    %vm857 = vcmask 1042432
    %v858 = vsel %vm857, %v855, %v831
    %v859 = vsel %vm857, %v856, %v832
    %vm860 = vcmask 1043456
    %v861 = vsel %vm860, %v858, %v835
    %v862 = vsel %vm860, %v859, %v836
    %vm863 = vcmask 1044480
    %v864 = vsel %vm863, %v861, %v839
    %v865 = vsel %vm863, %v862, %v840
    %vm866 = vcmask 1045504
    %v867 = vsel %vm866, %v864, %v843
    %v868 = vsel %vm866, %v865, %v844
    %vm869 = vcmask 1046528
    %v870 = vsel %vm869, %v867, %v847
    %v871 = vsel %vm869, %v868, %v848
    %v872 = vpack.c.bf16 %v871, %v870
    %v873 = vld [vmem:[#allocation10] sm:$0xf]
    %v874 = vld [vmem:[#allocation10 + $0x4] sm:$0xf]
    %v875 = vld [vmem:[#allocation10 + $0x8] sm:$0xf]
    %v876 = vld [vmem:[#allocation10 + $0xc] sm:$0xf]
    %v877 = vld [vmem:[%s8] sm:$0x1]
    %v879 = vperm.slane %v877, 0
    %882 = vrot.lane.b32.xlu0 %v872, 96
    %v883 = vpop.permute.xlu0 %882
    %v888 = vunpack.c.l.b16 %v873
    %v889 = vunpack.c.l.b16 %v874
    %v890 = vunpack.c.l.b16 %v875
    %v891 = vunpack.c.l.b16 %v876
    %v892 = vpack.c.b16 %v889, %v888
    %v893 = vpack.c.b16 %v891, %v890
    %v897 = vsel %vm168, %v883, 0
    %899 = vmatpush.bf16.msra.mxu0 0
    %900 = vmatpush.bf16.msra.mxu0 0
    %901 = vmatpush.bf16.msra.mxu0 0
    %902 = vmatpush.bf16.msra.mxu0 0
    %903 = vmatpush.bf16.msra.mxu0 0
    %904 = vmatpush.bf16.msra.mxu0 0
    %905 = vmatpush.bf16.msra.mxu0 %v893
    %906 = vmatpush.bf16.msra.mxu0 %v892
    %907 = vmatmul.bf16.gmra.mxu0 %v897
    %v908 = vpop.f32.mrf.mxu0
    %v909 = vadd.f32 %v879, %v908
    %v910 = vpop.f32.mrf.mxu0
    %v911 = vadd.f32 %v879, %v910
    %912 = vdwg.mxu0
    %913 = vst [vmem:[#allocation11] sm:$0xff] %v909
    %914 = vst [vmem:[#allocation11 + $0x8] sm:$0xff] %v911
    // Predicated region
    $region58: #{tpu_custom_call.1} parent=1 // pred_check
      _
    $region59: #{tpu_custom_call.1} parent=1 // pred_check_branch
      %916 = sbr.rel (0) target = $region61
    $region60: #{tpu_custom_call.1} parent=1 // pred_region
      %918 = vsyncadd [#allocation4], 0
      %s919 = sshll.u32 [#allocation11], 4
      %s920 = int_to_ptr.vmem [resolvable:$true] %s919
      %s921 = sshll.u32 %s9, 4
      %s922 = int_to_ptr.hbm [resolvable:$true] %s921
      %927 = dma.vmem_to_hbm [thread:$0]  %s920, 256, %s922, [#allocation4], 128, 128, 8
    $region61: #{tpu_custom_call.1} parent=1 // pred_fallthru
      _
    // Predicated region
    $region62: #{tpu_custom_call.1} parent=1 // pred_check
      _
    $region63: #{tpu_custom_call.1} parent=1 // pred_check_branch
      %929 = sbr.rel (0) target = $region65
    $region64: #{tpu_custom_call.1} parent=1 // pred_region
      %931 = dma.done [#allocation4], 256
    $region65: #{tpu_custom_call.1} parent=1 // pred_fallthru
      _
    %932 = vsyncpa [#allocation3], 1
    %933 = vsyncpa [#allocation6], 1
    %934 = vsyncpa [#allocation9], 1
    %935 = vsyncpa [#allocation4], 1

</llo_original>
